<compile_context>
chip_gen: v7x
topology: tpu7x:2x2x1
jax: 0.10.0
libtpu: 0.0.40
codegen_flags: <defaults>
</compile_context>

<pallas_src>
import jax
import jax.numpy as jnp
from jax.experimental import pallas as pl
from jax.experimental.pallas import tpu as pltpu


def _sigmoid(x):
    # tanh form keeps the gate on the EUP (no VPU divide).
    return 0.5 * (jnp.tanh(0.5 * x) + 1.0)


def _leaky_relu(x, slope=0.01):
    return jnp.where(x > 0, x, slope * x)


# Weight order must match the kernel signature below.
WEIGHT_NAMES = (
    "w_i_fused", "b_i_fused",   # fused GRU input-gate weight/bias, (C,3F)/(1,3F)
    "w_h_fused", "b_h_fused",   # fused GRU hidden-gate weight/bias, (F,3F)/(1,3F)
    "w_pf", "b_pf",             # FactorEncoder portfolio layer, (F,P)/(1,P)
    "w_mu", "b_mu",             # FactorEncoder mapping layer, (P,K)/(1,K)
    "w_dec", "b_dec",           # FactorDecoder fused [alpha-hidden ; beta], (F+K,F)/(F+K,1)
    "w_mua", "b_mua",           # FactorDecoder alpha head, (1,F)/(1,1)
)


def factorvae_fwd_kernel(
    chars_ref, returns_ref,
    w_i_ref, b_i_ref, w_h_ref, b_h_ref,
    w_pf_ref, b_pf_ref, w_mu_ref, b_mu_ref,
    w_dec_ref, b_dec_ref, w_mua_ref, b_mua_ref,
    out_ref,
):
    _, TN, C = chars_ref.shape
    N = returns_ref.shape[2]
    T = TN // N
    F = w_h_ref.shape[0]

    def bdot(a, b):
        # bf16 operands (MXU-native on all generations), f32 accumulation.
        return jnp.dot(a.astype(jnp.bfloat16), b.astype(jnp.bfloat16),
                       preferred_element_type=jnp.float32)

    # --- FeatureExtractor: single-layer GRU over time, keep last hidden ----
    # Hoisted input-gate projection: ONE MXU pass over all T timesteps against
    # the fused (C, 3F) gate weight; input biases folded in here.
    x_flat = chars_ref[0]                                    # (T*N, C) bf16
    gx_all = bdot(x_flat, w_i_ref[...]) + b_i_ref[...]       # (T*N, 3F) f32

    w_h = w_h_ref[...].astype(jnp.bfloat16)                  # hoisted, cast once
    b_h = b_h_ref[...]
    h = jnp.zeros((N, F), dtype=jnp.float32)
    # T is small & static here -> unrolled Python loop.
    # TODO(synk): at realistic T use lax.fori_loop(unroll=2..4) with pl.ds so
    # live ranges stay bounded (avoids vreg spills at F=128).
    for t in range(T):
        gx = gx_all[t * N:(t + 1) * N]                       # (N, 3F) contiguous slab
        gh = bdot(h, w_h) + b_h                              # (N, 3F) fused hidden gates
        # Per-gate slices: lane-aligned when F is a multiple of 128; at toy F
        # all three gates live inside a single vreg.
        r = _sigmoid(gx[:, 0:F] + gh[:, 0:F])
        z = _sigmoid(gx[:, F:2 * F] + gh[:, F:2 * F])
        n = jnp.tanh(gx[:, 2 * F:3 * F] + r * gh[:, 2 * F:3 * F])
        h = (1.0 - z) * n + z * h
    feats = h                                                # (N, F) f32

    # --- FactorEncoder: portfolio layer + mapping layer --------------------
    scores = bdot(feats, w_pf_ref[...]) + b_pf_ref[...]      # (N, P)
    scores = scores - jnp.max(scores, axis=0, keepdims=True)  # softmax over stocks
    e = jnp.exp(scores)
    pf_w = e * pl.reciprocal(jnp.sum(e, axis=0, keepdims=True), approx=True)
    ret_row = returns_ref[0]                                 # (1, N) lane-dense
    y_p = bdot(ret_row, pf_w)                                # (1, P)
    mu_z = bdot(y_p, w_mu_ref[...]) + b_mu_ref[...]          # (1, K)
    # TODO(synk): posterior sigma head + reparameterized sampling of z omitted;
    # the decoder consumes the posterior mean -> deterministic forward pass.
    factors = mu_z

    # --- FactorDecoder (transposed): everything stays lane-dense over N ----
    feats_t = jnp.transpose(feats)                           # (F, N): one small transpose
    dec = bdot(w_dec_ref[...], feats_t) + b_dec_ref[...]     # (F+K, N) fused alpha-hidden+beta
    h_a_t = _leaky_relu(dec[0:F, :])                         # (F, N)
    beta_t = dec[F:, :]                                      # (K, N)
    mu_alpha = bdot(w_mua_ref[...], h_a_t) + b_mua_ref[...]  # (1, N)
    mu_y = mu_alpha + bdot(factors, beta_t)                  # (1, N)

    # Lane-dense store: stocks on the lane axis, no output transpose.
    out_ref[0] = mu_y


def init_params(key, num_chars, num_factors, num_feats, num_pfs):
    """All weights are created directly in the fused, (in, out)-transposed
    layouts the kernel consumes.

    Mapping from torch parameters (done once at load time, free layout
    plumbing):
      w_i_fused = gru.weight_ih_l0.T                       # (C, 3F), [r|z|n]
      b_i_fused = [b_ir+b_hr | b_iz+b_hz | b_in]
      w_h_fused = gru.weight_hh_l0.T                       # (F, 3F)
      b_h_fused = [0 | 0 | b_hn]        (b_hn stays separate: multiplied by r)
      w_dec     = concat([alpha_hidden.weight, beta.weight], axis=0)  # (F+K, F)
      b_dec     = concat([alpha_hidden.bias,   beta.bias])[:, None]
    For this randomly-initialised demo every chunk just gets random values.
    """
    C, K, F, P = num_chars, num_factors, num_feats, num_pfs
    shapes = dict(
        w_i_fused=(C, 3 * F), b_i_fused=(1, 3 * F),
        w_h_fused=(F, 3 * F), b_h_fused=(1, 3 * F),
        w_pf=(F, P), b_pf=(1, P),
        w_mu=(P, K), b_mu=(1, K),
        w_dec=(F + K, F), b_dec=(F + K, 1),
        w_mua=(1, F), b_mua=(1, 1),
    )
    keys = jax.random.split(key, len(shapes))
    return {name: 0.1 * jax.random.normal(k, shape, dtype=jnp.float32)
            for (name, shape), k in zip(shapes.items(), keys)}


@jax.jit
def factorvae_forward_batched(params, chars, returns):
    """chars: (B, N, T, C) batch_first layout; returns: (B, N)."""
    B, N, T, C = chars.shape
    # Time-major, flattened (T*N, C) slab per date: the hoisted input-gate
    # matmul consumes it directly and per-timestep gate slabs are contiguous.
    # bf16 halves chars HBM/VMEM traffic (accumulation stays f32).
    # (Upstream data pipelines should ideally produce this layout directly.)
    chars_2d = jnp.transpose(chars, (0, 2, 1, 3)).reshape(B, T * N, C)
    chars_2d = chars_2d.astype(jnp.bfloat16)
    returns3 = returns.reshape(B, 1, N).astype(jnp.float32)
    weights = tuple(params[k] for k in WEIGHT_NAMES)

    # Weights: full-array blocks with constant index maps -> DMA'd to VMEM once
    # and kept resident across the B grid.
    # TODO(synk): pipeline_mode=pl.Buffered(1) here frees the 2x double-buffer
    # headroom on v7x once F/P/C grow to production sizes.
    w_specs = [pl.BlockSpec(w.shape, lambda b, nd=w.ndim: (0,) * nd)
               for w in weights]
    in_specs = [
        pl.BlockSpec((1, T * N, C), lambda b: (b, 0, 0)),   # chars, time-major slab
        pl.BlockSpec((1, 1, N), lambda b: (b, 0, 0)),       # returns, lane-dense row
    ] + w_specs

    out = pl.pallas_call(
        factorvae_fwd_kernel,
        out_shape=jax.ShapeDtypeStruct((B, 1, N), jnp.float32),
        grid=(B,),
        in_specs=in_specs,
        out_specs=pl.BlockSpec((1, 1, N), lambda b: (b, 0, 0)),
        compiler_params=pltpu.CompilerParams(
            # Cross-sections are independent -> parallel (both TCs on v7x).
            dimension_semantics=("parallel",),
            # Raise scoped VMEM so full-sequence chars blocks stay usable on
            # the 128 MiB chips; size this down / block per timestep on v7x.
            vmem_limit_bytes=64 * 1024 * 1024,
        ),
    )(chars_2d, returns3, *weights)
    return out.reshape(B, N)


def factorvae_forward(params, chars, returns):
    """Single cross-section, matching the PyTorch module: chars (N,T,C), returns (N,)."""
    return factorvae_forward_batched(params, chars[None], returns[None])[0]


def factorvae_reference(params, chars, returns):
    """Pure-JAX reference (same bf16-matmul / f32-accumulate precision recipe)."""
    p = params
    F = p["w_h_fused"].shape[0]
    chars = chars.astype(jnp.float32)
    returns = returns.astype(jnp.float32)

    def bdot(a, b):
        return jnp.dot(a.astype(jnp.bfloat16), b.astype(jnp.bfloat16),
                       preferred_element_type=jnp.float32)

    def one(ch, ret):                       # ch: (N, T, C), ret: (N,)
        N, T, C = ch.shape
        h = jnp.zeros((N, F), jnp.float32)
        for t in range(T):
            x_t = ch[:, t, :]
            gx = bdot(x_t, p["w_i_fused"]) + p["b_i_fused"]
            gh = bdot(h, p["w_h_fused"]) + p["b_h_fused"]
            r = _sigmoid(gx[:, 0:F] + gh[:, 0:F])
            z = _sigmoid(gx[:, F:2 * F] + gh[:, F:2 * F])
            n = jnp.tanh(gx[:, 2 * F:3 * F] + r * gh[:, 2 * F:3 * F])
            h = (1.0 - z) * n + z * h
        feats = h
        pf_w = jax.nn.softmax(bdot(feats, p["w_pf"]) + p["b_pf"], axis=0)   # (N, P)
        y_p = bdot(ret[None, :], pf_w)                                      # (1, P)
        mu_z = bdot(y_p, p["w_mu"]) + p["b_mu"]                             # (1, K)
        w_h_dec = p["w_dec"][:F].T                                          # (F, F)
        w_beta = p["w_dec"][F:].T                                           # (F, K)
        b_h_dec = p["b_dec"][:F, 0][None, :]
        b_beta = p["b_dec"][F:, 0][None, :]
        h_a = _leaky_relu(bdot(feats, w_h_dec) + b_h_dec)
        mu_alpha = jnp.sum(h_a * p["w_mua"], axis=-1, keepdims=True) + p["b_mua"]
        beta = bdot(feats, w_beta) + b_beta
        mu_y = mu_alpha + jnp.sum(beta * mu_z, axis=-1, keepdims=True)
        return mu_y[:, 0]

    return jax.vmap(one)(chars, returns)


if __name__ == "__main__":
    num_dates = 4       # B: independent cross-sections (grid axis, "parallel")
    num_stocks = 8      # N
    seq_len = 8         # T
    num_chars = 16      # C
    num_feats = 32      # F
    num_factors = 8     # K
    num_pfs = 16        # P

    key = jax.random.PRNGKey(0)
    k_params, k_chars, k_ret = jax.random.split(key, 3)

    params = init_params(k_params, num_chars, num_factors, num_feats, num_pfs)
    chars = jax.random.normal(
        k_chars, (num_dates, num_stocks, seq_len, num_chars), jnp.float32)
    returns = jax.random.normal(k_ret, (num_dates, num_stocks), jnp.float32)

    out = factorvae_forward_batched(params, chars, returns)
    jax.block_until_ready(out)
    assert out.shape == (num_dates, num_stocks)

    ref = factorvae_reference(params, chars, returns)
    max_diff = float(jnp.max(jnp.abs(out - ref)))
    assert bool(jnp.allclose(out, ref, rtol=5e-2, atol=1e-2)), max_diff

    # Single cross-section path (matches the PyTorch module's forward signature).
    out1 = factorvae_forward(params, chars[0], returns[0])
    jax.block_until_ready(out1)
    assert out1.shape == (num_stocks,)

    print("KERNEL_OK")
</pallas_src>

<mosaic_0001>
module attributes {stable_mosaic.version = 11 : i64} {
  func.func @factorvae_fwd_kernel(%arg0: i32, %arg1: memref<1x64x16xbf16, #tpu.memory_space<vmem>>, %arg2: memref<1x1x8xf32, #tpu.memory_space<vmem>>, %arg3: memref<16x96xf32, #tpu.memory_space<vmem>>, %arg4: memref<1x96xf32, #tpu.memory_space<vmem>>, %arg5: memref<32x96xf32, #tpu.memory_space<vmem>>, %arg6: memref<1x96xf32, #tpu.memory_space<vmem>>, %arg7: memref<32x16xf32, #tpu.memory_space<vmem>>, %arg8: memref<1x16xf32, #tpu.memory_space<vmem>>, %arg9: memref<16x8xf32, #tpu.memory_space<vmem>>, %arg10: memref<1x8xf32, #tpu.memory_space<vmem>>, %arg11: memref<40x32xf32, #tpu.memory_space<vmem>>, %arg12: memref<40x1xf32, #tpu.memory_space<vmem>>, %arg13: memref<1x32xf32, #tpu.memory_space<vmem>>, %arg14: memref<1x1xf32, #tpu.memory_space<vmem>>, %arg15: memref<1x1x8xf32, #tpu.memory_space<vmem>>) attributes {dimension_semantics = [#tpu.dimension_semantics<parallel>], iteration_bounds = array<i64: 4>, scalar_prefetch = 0 : i64, scratch_operands = 0 : i64, tpu.core_type = #tpu.core_type<tc>, window_params = [{transform_indices = @transform_0, window_bounds = array<i64: 1, 64, 16>}, {transform_indices = @transform_1, window_bounds = array<i64: 1, 1, 8>}, {pipeline_mode = #tpu.pipeline_mode<synchronous>, transform_indices = @transform_2, window_bounds = array<i64: 16, 96>}, {pipeline_mode = #tpu.pipeline_mode<synchronous>, transform_indices = @transform_3, window_bounds = array<i64: 1, 96>}, {pipeline_mode = #tpu.pipeline_mode<synchronous>, transform_indices = @transform_4, window_bounds = array<i64: 32, 96>}, {pipeline_mode = #tpu.pipeline_mode<synchronous>, transform_indices = @transform_5, window_bounds = array<i64: 1, 96>}, {pipeline_mode = #tpu.pipeline_mode<synchronous>, transform_indices = @transform_6, window_bounds = array<i64: 32, 16>}, {pipeline_mode = #tpu.pipeline_mode<synchronous>, transform_indices = @transform_7, window_bounds = array<i64: 1, 16>}, {pipeline_mode = #tpu.pipeline_mode<synchronous>, transform_indices = @transform_8, window_bounds = array<i64: 16, 8>}, {pipeline_mode = #tpu.pipeline_mode<synchronous>, transform_indices = @transform_9, window_bounds = array<i64: 1, 8>}, {pipeline_mode = #tpu.pipeline_mode<synchronous>, transform_indices = @transform_10, window_bounds = array<i64: 40, 32>}, {pipeline_mode = #tpu.pipeline_mode<synchronous>, transform_indices = @transform_11, window_bounds = array<i64: 40, 1>}, {pipeline_mode = #tpu.pipeline_mode<synchronous>, transform_indices = @transform_12, window_bounds = array<i64: 1, 32>}, {pipeline_mode = #tpu.pipeline_mode<synchronous>, transform_indices = @transform_13, window_bounds = array<i64: 1, 1>}, {transform_indices = @transform_14, window_bounds = array<i64: 1, 1, 8>}]} {
    %c0 = arith.constant 0 : index
    %c0_0 = arith.constant 0 : index
    %c0_1 = arith.constant 0 : index
    %0 = vector.load %arg1[%c0, %c0_0, %c0_1] : memref<1x64x16xbf16, #tpu.memory_space<vmem>>, vector<1x64x16xbf16>
    %1 = vector.shape_cast %0 : vector<1x64x16xbf16> to vector<64x16xbf16>
    %c0_2 = arith.constant 0 : index
    %c0_3 = arith.constant 0 : index
    %2 = vector.load %arg3[%c0_2, %c0_3] : memref<16x96xf32, #tpu.memory_space<vmem>>, vector<16x96xf32>
    %3 = arith.truncf %2 : vector<16x96xf32> to vector<16x96xbf16>
    %cst = arith.constant dense<0.000000e+00> : vector<64x96xf32>
    %4 = tpu.matmul %1, %3, %cst {dimension_numbers = #tpu.dot_dimension_numbers<[1], [0], [0], [1], [0, 0, 1, 1], [], []>} : vector<64x16xbf16>, vector<16x96xbf16>, vector<64x96xf32> -> vector<64x96xf32>
    %c0_4 = arith.constant 0 : index
    %c0_5 = arith.constant 0 : index
    %5 = vector.load %arg4[%c0_4, %c0_5] : memref<1x96xf32, #tpu.memory_space<vmem>>, vector<1x96xf32>
    %6 = vector.broadcast %5 : vector<1x96xf32> to vector<64x96xf32>
    %7 = arith.addf %4, %6 : vector<64x96xf32>
    %c0_6 = arith.constant 0 : index
    %c0_7 = arith.constant 0 : index
    %8 = vector.load %arg5[%c0_6, %c0_7] : memref<32x96xf32, #tpu.memory_space<vmem>>, vector<32x96xf32>
    %9 = arith.truncf %8 : vector<32x96xf32> to vector<32x96xbf16>
    %c0_8 = arith.constant 0 : index
    %c0_9 = arith.constant 0 : index
    %10 = vector.load %arg6[%c0_8, %c0_9] : memref<1x96xf32, #tpu.memory_space<vmem>>, vector<1x96xf32>
    %cst_10 = arith.constant 0.000000e+00 : f32
    %11 = vector.broadcast %cst_10 : f32 to vector<8x32xf32>
    %12 = vector.extract_strided_slice %7 {offsets = [0, 0], sizes = [8, 96], strides = [1, 1]} : vector<64x96xf32> to vector<8x96xf32>
    %13 = arith.truncf %11 : vector<8x32xf32> to vector<8x32xbf16>
    %cst_11 = arith.constant dense<0.000000e+00> : vector<8x96xf32>
    %14 = tpu.matmul %13, %9, %cst_11 {dimension_numbers = #tpu.dot_dimension_numbers<[1], [0], [0], [1], [0, 0, 1, 1], [], []>} : vector<8x32xbf16>, vector<32x96xbf16>, vector<8x96xf32> -> vector<8x96xf32>
    %15 = vector.broadcast %10 : vector<1x96xf32> to vector<8x96xf32>
    %16 = arith.addf %14, %15 : vector<8x96xf32>
    %17 = vector.extract_strided_slice %12 {offsets = [0, 0], sizes = [8, 32], strides = [1, 1]} : vector<8x96xf32> to vector<8x32xf32>
    %18 = vector.extract_strided_slice %16 {offsets = [0, 0], sizes = [8, 32], strides = [1, 1]} : vector<8x96xf32> to vector<8x32xf32>
    %19 = arith.addf %17, %18 : vector<8x32xf32>
    %cst_12 = arith.constant 5.000000e-01 : f32
    %20 = vector.broadcast %cst_12 : f32 to vector<8x32xf32>
    %21 = arith.mulf %20, %19 : vector<8x32xf32>
    %22 = math.tanh %21 : vector<8x32xf32>
    %cst_13 = arith.constant 1.000000e+00 : f32
    %23 = vector.broadcast %cst_13 : f32 to vector<8x32xf32>
    %24 = arith.addf %22, %23 : vector<8x32xf32>
    %cst_14 = arith.constant 5.000000e-01 : f32
    %25 = vector.broadcast %cst_14 : f32 to vector<8x32xf32>
    %26 = arith.mulf %25, %24 : vector<8x32xf32>
    %27 = vector.extract_strided_slice %12 {offsets = [0, 32], sizes = [8, 32], strides = [1, 1]} : vector<8x96xf32> to vector<8x32xf32>
    %28 = vector.extract_strided_slice %16 {offsets = [0, 32], sizes = [8, 32], strides = [1, 1]} : vector<8x96xf32> to vector<8x32xf32>
    %29 = arith.addf %27, %28 : vector<8x32xf32>
    %cst_15 = arith.constant 5.000000e-01 : f32
    %30 = vector.broadcast %cst_15 : f32 to vector<8x32xf32>
    %31 = arith.mulf %30, %29 : vector<8x32xf32>
    %32 = math.tanh %31 : vector<8x32xf32>
    %cst_16 = arith.constant 1.000000e+00 : f32
    %33 = vector.broadcast %cst_16 : f32 to vector<8x32xf32>
    %34 = arith.addf %32, %33 : vector<8x32xf32>
    %cst_17 = arith.constant 5.000000e-01 : f32
    %35 = vector.broadcast %cst_17 : f32 to vector<8x32xf32>
    %36 = arith.mulf %35, %34 : vector<8x32xf32>
    %37 = vector.extract_strided_slice %12 {offsets = [0, 64], sizes = [8, 32], strides = [1, 1]} : vector<8x96xf32> to vector<8x32xf32>
    %38 = vector.extract_strided_slice %16 {offsets = [0, 64], sizes = [8, 32], strides = [1, 1]} : vector<8x96xf32> to vector<8x32xf32>
    %39 = arith.mulf %26, %38 : vector<8x32xf32>
    %40 = arith.addf %37, %39 : vector<8x32xf32>
    %41 = math.tanh %40 : vector<8x32xf32>
    %cst_18 = arith.constant 1.000000e+00 : f32
    %42 = vector.broadcast %cst_18 : f32 to vector<8x32xf32>
    %43 = arith.subf %42, %36 : vector<8x32xf32>
    %44 = arith.mulf %43, %41 : vector<8x32xf32>
    %45 = arith.mulf %36, %11 : vector<8x32xf32>
    %46 = arith.addf %44, %45 : vector<8x32xf32>
    %47 = vector.extract_strided_slice %7 {offsets = [8, 0], sizes = [8, 96], strides = [1, 1]} : vector<64x96xf32> to vector<8x96xf32>
    %48 = arith.truncf %46 : vector<8x32xf32> to vector<8x32xbf16>
    %cst_19 = arith.constant dense<0.000000e+00> : vector<8x96xf32>
    %49 = tpu.matmul %48, %9, %cst_19 {dimension_numbers = #tpu.dot_dimension_numbers<[1], [0], [0], [1], [0, 0, 1, 1], [], []>} : vector<8x32xbf16>, vector<32x96xbf16>, vector<8x96xf32> -> vector<8x96xf32>
    %50 = vector.broadcast %10 : vector<1x96xf32> to vector<8x96xf32>
    %51 = arith.addf %49, %50 : vector<8x96xf32>
    %52 = vector.extract_strided_slice %47 {offsets = [0, 0], sizes = [8, 32], strides = [1, 1]} : vector<8x96xf32> to vector<8x32xf32>
    %53 = vector.extract_strided_slice %51 {offsets = [0, 0], sizes = [8, 32], strides = [1, 1]} : vector<8x96xf32> to vector<8x32xf32>
    %54 = arith.addf %52, %53 : vector<8x32xf32>
    %cst_20 = arith.constant 5.000000e-01 : f32
    %55 = vector.broadcast %cst_20 : f32 to vector<8x32xf32>
    %56 = arith.mulf %55, %54 : vector<8x32xf32>
    %57 = math.tanh %56 : vector<8x32xf32>
    %cst_21 = arith.constant 1.000000e+00 : f32
    %58 = vector.broadcast %cst_21 : f32 to vector<8x32xf32>
    %59 = arith.addf %57, %58 : vector<8x32xf32>
    %cst_22 = arith.constant 5.000000e-01 : f32
    %60 = vector.broadcast %cst_22 : f32 to vector<8x32xf32>
    %61 = arith.mulf %60, %59 : vector<8x32xf32>
    %62 = vector.extract_strided_slice %47 {offsets = [0, 32], sizes = [8, 32], strides = [1, 1]} : vector<8x96xf32> to vector<8x32xf32>
    %63 = vector.extract_strided_slice %51 {offsets = [0, 32], sizes = [8, 32], strides = [1, 1]} : vector<8x96xf32> to vector<8x32xf32>
    %64 = arith.addf %62, %63 : vector<8x32xf32>
    %cst_23 = arith.constant 5.000000e-01 : f32
    %65 = vector.broadcast %cst_23 : f32 to vector<8x32xf32>
    %66 = arith.mulf %65, %64 : vector<8x32xf32>
    %67 = math.tanh %66 : vector<8x32xf32>
    %cst_24 = arith.constant 1.000000e+00 : f32
    %68 = vector.broadcast %cst_24 : f32 to vector<8x32xf32>
    %69 = arith.addf %67, %68 : vector<8x32xf32>
    %cst_25 = arith.constant 5.000000e-01 : f32
    %70 = vector.broadcast %cst_25 : f32 to vector<8x32xf32>
    %71 = arith.mulf %70, %69 : vector<8x32xf32>
    %72 = vector.extract_strided_slice %47 {offsets = [0, 64], sizes = [8, 32], strides = [1, 1]} : vector<8x96xf32> to vector<8x32xf32>
    %73 = vector.extract_strided_slice %51 {offsets = [0, 64], sizes = [8, 32], strides = [1, 1]} : vector<8x96xf32> to vector<8x32xf32>
    %74 = arith.mulf %61, %73 : vector<8x32xf32>
    %75 = arith.addf %72, %74 : vector<8x32xf32>
    %76 = math.tanh %75 : vector<8x32xf32>
    %cst_26 = arith.constant 1.000000e+00 : f32
    %77 = vector.broadcast %cst_26 : f32 to vector<8x32xf32>
    %78 = arith.subf %77, %71 : vector<8x32xf32>
    %79 = arith.mulf %78, %76 : vector<8x32xf32>
    %80 = arith.mulf %71, %46 : vector<8x32xf32>
    %81 = arith.addf %79, %80 : vector<8x32xf32>
    %82 = vector.extract_strided_slice %7 {offsets = [16, 0], sizes = [8, 96], strides = [1, 1]} : vector<64x96xf32> to vector<8x96xf32>
    %83 = arith.truncf %81 : vector<8x32xf32> to vector<8x32xbf16>
    %cst_27 = arith.constant dense<0.000000e+00> : vector<8x96xf32>
    %84 = tpu.matmul %83, %9, %cst_27 {dimension_numbers = #tpu.dot_dimension_numbers<[1], [0], [0], [1], [0, 0, 1, 1], [], []>} : vector<8x32xbf16>, vector<32x96xbf16>, vector<8x96xf32> -> vector<8x96xf32>
    %85 = vector.broadcast %10 : vector<1x96xf32> to vector<8x96xf32>
    %86 = arith.addf %84, %85 : vector<8x96xf32>
    %87 = vector.extract_strided_slice %82 {offsets = [0, 0], sizes = [8, 32], strides = [1, 1]} : vector<8x96xf32> to vector<8x32xf32>
    %88 = vector.extract_strided_slice %86 {offsets = [0, 0], sizes = [8, 32], strides = [1, 1]} : vector<8x96xf32> to vector<8x32xf32>
    %89 = arith.addf %87, %88 : vector<8x32xf32>
    %cst_28 = arith.constant 5.000000e-01 : f32
    %90 = vector.broadcast %cst_28 : f32 to vector<8x32xf32>
    %91 = arith.mulf %90, %89 : vector<8x32xf32>
    %92 = math.tanh %91 : vector<8x32xf32>
    %cst_29 = arith.constant 1.000000e+00 : f32
    %93 = vector.broadcast %cst_29 : f32 to vector<8x32xf32>
    %94 = arith.addf %92, %93 : vector<8x32xf32>
    %cst_30 = arith.constant 5.000000e-01 : f32
    %95 = vector.broadcast %cst_30 : f32 to vector<8x32xf32>
    %96 = arith.mulf %95, %94 : vector<8x32xf32>
    %97 = vector.extract_strided_slice %82 {offsets = [0, 32], sizes = [8, 32], strides = [1, 1]} : vector<8x96xf32> to vector<8x32xf32>
    %98 = vector.extract_strided_slice %86 {offsets = [0, 32], sizes = [8, 32], strides = [1, 1]} : vector<8x96xf32> to vector<8x32xf32>
    %99 = arith.addf %97, %98 : vector<8x32xf32>
    %cst_31 = arith.constant 5.000000e-01 : f32
    %100 = vector.broadcast %cst_31 : f32 to vector<8x32xf32>
    %101 = arith.mulf %100, %99 : vector<8x32xf32>
    %102 = math.tanh %101 : vector<8x32xf32>
    %cst_32 = arith.constant 1.000000e+00 : f32
    %103 = vector.broadcast %cst_32 : f32 to vector<8x32xf32>
    %104 = arith.addf %102, %103 : vector<8x32xf32>
    %cst_33 = arith.constant 5.000000e-01 : f32
    %105 = vector.broadcast %cst_33 : f32 to vector<8x32xf32>
    %106 = arith.mulf %105, %104 : vector<8x32xf32>
    %107 = vector.extract_strided_slice %82 {offsets = [0, 64], sizes = [8, 32], strides = [1, 1]} : vector<8x96xf32> to vector<8x32xf32>
    %108 = vector.extract_strided_slice %86 {offsets = [0, 64], sizes = [8, 32], strides = [1, 1]} : vector<8x96xf32> to vector<8x32xf32>
    %109 = arith.mulf %96, %108 : vector<8x32xf32>
    %110 = arith.addf %107, %109 : vector<8x32xf32>
    %111 = math.tanh %110 : vector<8x32xf32>
    %cst_34 = arith.constant 1.000000e+00 : f32
    %112 = vector.broadcast %cst_34 : f32 to vector<8x32xf32>
    %113 = arith.subf %112, %106 : vector<8x32xf32>
    %114 = arith.mulf %113, %111 : vector<8x32xf32>
    %115 = arith.mulf %106, %81 : vector<8x32xf32>
    %116 = arith.addf %114, %115 : vector<8x32xf32>
    %117 = vector.extract_strided_slice %7 {offsets = [24, 0], sizes = [8, 96], strides = [1, 1]} : vector<64x96xf32> to vector<8x96xf32>
    %118 = arith.truncf %116 : vector<8x32xf32> to vector<8x32xbf16>
    %cst_35 = arith.constant dense<0.000000e+00> : vector<8x96xf32>
    %119 = tpu.matmul %118, %9, %cst_35 {dimension_numbers = #tpu.dot_dimension_numbers<[1], [0], [0], [1], [0, 0, 1, 1], [], []>} : vector<8x32xbf16>, vector<32x96xbf16>, vector<8x96xf32> -> vector<8x96xf32>
    %120 = vector.broadcast %10 : vector<1x96xf32> to vector<8x96xf32>
    %121 = arith.addf %119, %120 : vector<8x96xf32>
    %122 = vector.extract_strided_slice %117 {offsets = [0, 0], sizes = [8, 32], strides = [1, 1]} : vector<8x96xf32> to vector<8x32xf32>
    %123 = vector.extract_strided_slice %121 {offsets = [0, 0], sizes = [8, 32], strides = [1, 1]} : vector<8x96xf32> to vector<8x32xf32>
    %124 = arith.addf %122, %123 : vector<8x32xf32>
    %cst_36 = arith.constant 5.000000e-01 : f32
    %125 = vector.broadcast %cst_36 : f32 to vector<8x32xf32>
    %126 = arith.mulf %125, %124 : vector<8x32xf32>
    %127 = math.tanh %126 : vector<8x32xf32>
    %cst_37 = arith.constant 1.000000e+00 : f32
    %128 = vector.broadcast %cst_37 : f32 to vector<8x32xf32>
    %129 = arith.addf %127, %128 : vector<8x32xf32>
    %cst_38 = arith.constant 5.000000e-01 : f32
    %130 = vector.broadcast %cst_38 : f32 to vector<8x32xf32>
    %131 = arith.mulf %130, %129 : vector<8x32xf32>
    %132 = vector.extract_strided_slice %117 {offsets = [0, 32], sizes = [8, 32], strides = [1, 1]} : vector<8x96xf32> to vector<8x32xf32>
    %133 = vector.extract_strided_slice %121 {offsets = [0, 32], sizes = [8, 32], strides = [1, 1]} : vector<8x96xf32> to vector<8x32xf32>
    %134 = arith.addf %132, %133 : vector<8x32xf32>
    %cst_39 = arith.constant 5.000000e-01 : f32
    %135 = vector.broadcast %cst_39 : f32 to vector<8x32xf32>
    %136 = arith.mulf %135, %134 : vector<8x32xf32>
    %137 = math.tanh %136 : vector<8x32xf32>
    %cst_40 = arith.constant 1.000000e+00 : f32
    %138 = vector.broadcast %cst_40 : f32 to vector<8x32xf32>
    %139 = arith.addf %137, %138 : vector<8x32xf32>
    %cst_41 = arith.constant 5.000000e-01 : f32
    %140 = vector.broadcast %cst_41 : f32 to vector<8x32xf32>
    %141 = arith.mulf %140, %139 : vector<8x32xf32>
    %142 = vector.extract_strided_slice %117 {offsets = [0, 64], sizes = [8, 32], strides = [1, 1]} : vector<8x96xf32> to vector<8x32xf32>
    %143 = vector.extract_strided_slice %121 {offsets = [0, 64], sizes = [8, 32], strides = [1, 1]} : vector<8x96xf32> to vector<8x32xf32>
    %144 = arith.mulf %131, %143 : vector<8x32xf32>
    %145 = arith.addf %142, %144 : vector<8x32xf32>
    %146 = math.tanh %145 : vector<8x32xf32>
    %cst_42 = arith.constant 1.000000e+00 : f32
    %147 = vector.broadcast %cst_42 : f32 to vector<8x32xf32>
    %148 = arith.subf %147, %141 : vector<8x32xf32>
    %149 = arith.mulf %148, %146 : vector<8x32xf32>
    %150 = arith.mulf %141, %116 : vector<8x32xf32>
    %151 = arith.addf %149, %150 : vector<8x32xf32>
    %152 = vector.extract_strided_slice %7 {offsets = [32, 0], sizes = [8, 96], strides = [1, 1]} : vector<64x96xf32> to vector<8x96xf32>
    %153 = arith.truncf %151 : vector<8x32xf32> to vector<8x32xbf16>
    %cst_43 = arith.constant dense<0.000000e+00> : vector<8x96xf32>
    %154 = tpu.matmul %153, %9, %cst_43 {dimension_numbers = #tpu.dot_dimension_numbers<[1], [0], [0], [1], [0, 0, 1, 1], [], []>} : vector<8x32xbf16>, vector<32x96xbf16>, vector<8x96xf32> -> vector<8x96xf32>
    %155 = vector.broadcast %10 : vector<1x96xf32> to vector<8x96xf32>
    %156 = arith.addf %154, %155 : vector<8x96xf32>
    %157 = vector.extract_strided_slice %152 {offsets = [0, 0], sizes = [8, 32], strides = [1, 1]} : vector<8x96xf32> to vector<8x32xf32>
    %158 = vector.extract_strided_slice %156 {offsets = [0, 0], sizes = [8, 32], strides = [1, 1]} : vector<8x96xf32> to vector<8x32xf32>
    %159 = arith.addf %157, %158 : vector<8x32xf32>
    %cst_44 = arith.constant 5.000000e-01 : f32
    %160 = vector.broadcast %cst_44 : f32 to vector<8x32xf32>
    %161 = arith.mulf %160, %159 : vector<8x32xf32>
    %162 = math.tanh %161 : vector<8x32xf32>
    %cst_45 = arith.constant 1.000000e+00 : f32
    %163 = vector.broadcast %cst_45 : f32 to vector<8x32xf32>
    %164 = arith.addf %162, %163 : vector<8x32xf32>
    %cst_46 = arith.constant 5.000000e-01 : f32
    %165 = vector.broadcast %cst_46 : f32 to vector<8x32xf32>
    %166 = arith.mulf %165, %164 : vector<8x32xf32>
    %167 = vector.extract_strided_slice %152 {offsets = [0, 32], sizes = [8, 32], strides = [1, 1]} : vector<8x96xf32> to vector<8x32xf32>
    %168 = vector.extract_strided_slice %156 {offsets = [0, 32], sizes = [8, 32], strides = [1, 1]} : vector<8x96xf32> to vector<8x32xf32>
    %169 = arith.addf %167, %168 : vector<8x32xf32>
    %cst_47 = arith.constant 5.000000e-01 : f32
    %170 = vector.broadcast %cst_47 : f32 to vector<8x32xf32>
    %171 = arith.mulf %170, %169 : vector<8x32xf32>
    %172 = math.tanh %171 : vector<8x32xf32>
    %cst_48 = arith.constant 1.000000e+00 : f32
    %173 = vector.broadcast %cst_48 : f32 to vector<8x32xf32>
    %174 = arith.addf %172, %173 : vector<8x32xf32>
    %cst_49 = arith.constant 5.000000e-01 : f32
    %175 = vector.broadcast %cst_49 : f32 to vector<8x32xf32>
    %176 = arith.mulf %175, %174 : vector<8x32xf32>
    %177 = vector.extract_strided_slice %152 {offsets = [0, 64], sizes = [8, 32], strides = [1, 1]} : vector<8x96xf32> to vector<8x32xf32>
    %178 = vector.extract_strided_slice %156 {offsets = [0, 64], sizes = [8, 32], strides = [1, 1]} : vector<8x96xf32> to vector<8x32xf32>
    %179 = arith.mulf %166, %178 : vector<8x32xf32>
    %180 = arith.addf %177, %179 : vector<8x32xf32>
    %181 = math.tanh %180 : vector<8x32xf32>
    %cst_50 = arith.constant 1.000000e+00 : f32
    %182 = vector.broadcast %cst_50 : f32 to vector<8x32xf32>
    %183 = arith.subf %182, %176 : vector<8x32xf32>
    %184 = arith.mulf %183, %181 : vector<8x32xf32>
    %185 = arith.mulf %176, %151 : vector<8x32xf32>
    %186 = arith.addf %184, %185 : vector<8x32xf32>
    %187 = vector.extract_strided_slice %7 {offsets = [40, 0], sizes = [8, 96], strides = [1, 1]} : vector<64x96xf32> to vector<8x96xf32>
    %188 = arith.truncf %186 : vector<8x32xf32> to vector<8x32xbf16>
    %cst_51 = arith.constant dense<0.000000e+00> : vector<8x96xf32>
    %189 = tpu.matmul %188, %9, %cst_51 {dimension_numbers = #tpu.dot_dimension_numbers<[1], [0], [0], [1], [0, 0, 1, 1], [], []>} : vector<8x32xbf16>, vector<32x96xbf16>, vector<8x96xf32> -> vector<8x96xf32>
    %190 = vector.broadcast %10 : vector<1x96xf32> to vector<8x96xf32>
    %191 = arith.addf %189, %190 : vector<8x96xf32>
    %192 = vector.extract_strided_slice %187 {offsets = [0, 0], sizes = [8, 32], strides = [1, 1]} : vector<8x96xf32> to vector<8x32xf32>
    %193 = vector.extract_strided_slice %191 {offsets = [0, 0], sizes = [8, 32], strides = [1, 1]} : vector<8x96xf32> to vector<8x32xf32>
    %194 = arith.addf %192, %193 : vector<8x32xf32>
    %cst_52 = arith.constant 5.000000e-01 : f32
    %195 = vector.broadcast %cst_52 : f32 to vector<8x32xf32>
    %196 = arith.mulf %195, %194 : vector<8x32xf32>
    %197 = math.tanh %196 : vector<8x32xf32>
    %cst_53 = arith.constant 1.000000e+00 : f32
    %198 = vector.broadcast %cst_53 : f32 to vector<8x32xf32>
    %199 = arith.addf %197, %198 : vector<8x32xf32>
    %cst_54 = arith.constant 5.000000e-01 : f32
    %200 = vector.broadcast %cst_54 : f32 to vector<8x32xf32>
    %201 = arith.mulf %200, %199 : vector<8x32xf32>
    %202 = vector.extract_strided_slice %187 {offsets = [0, 32], sizes = [8, 32], strides = [1, 1]} : vector<8x96xf32> to vector<8x32xf32>
    %203 = vector.extract_strided_slice %191 {offsets = [0, 32], sizes = [8, 32], strides = [1, 1]} : vector<8x96xf32> to vector<8x32xf32>
    %204 = arith.addf %202, %203 : vector<8x32xf32>
    %cst_55 = arith.constant 5.000000e-01 : f32
    %205 = vector.broadcast %cst_55 : f32 to vector<8x32xf32>
    %206 = arith.mulf %205, %204 : vector<8x32xf32>
    %207 = math.tanh %206 : vector<8x32xf32>
    %cst_56 = arith.constant 1.000000e+00 : f32
    %208 = vector.broadcast %cst_56 : f32 to vector<8x32xf32>
    %209 = arith.addf %207, %208 : vector<8x32xf32>
    %cst_57 = arith.constant 5.000000e-01 : f32
    %210 = vector.broadcast %cst_57 : f32 to vector<8x32xf32>
    %211 = arith.mulf %210, %209 : vector<8x32xf32>
    %212 = vector.extract_strided_slice %187 {offsets = [0, 64], sizes = [8, 32], strides = [1, 1]} : vector<8x96xf32> to vector<8x32xf32>
    %213 = vector.extract_strided_slice %191 {offsets = [0, 64], sizes = [8, 32], strides = [1, 1]} : vector<8x96xf32> to vector<8x32xf32>
    %214 = arith.mulf %201, %213 : vector<8x32xf32>
    %215 = arith.addf %212, %214 : vector<8x32xf32>
    %216 = math.tanh %215 : vector<8x32xf32>
    %cst_58 = arith.constant 1.000000e+00 : f32
    %217 = vector.broadcast %cst_58 : f32 to vector<8x32xf32>
    %218 = arith.subf %217, %211 : vector<8x32xf32>
    %219 = arith.mulf %218, %216 : vector<8x32xf32>
    %220 = arith.mulf %211, %186 : vector<8x32xf32>
    %221 = arith.addf %219, %220 : vector<8x32xf32>
    %222 = vector.extract_strided_slice %7 {offsets = [48, 0], sizes = [8, 96], strides = [1, 1]} : vector<64x96xf32> to vector<8x96xf32>
    %223 = arith.truncf %221 : vector<8x32xf32> to vector<8x32xbf16>
    %cst_59 = arith.constant dense<0.000000e+00> : vector<8x96xf32>
    %224 = tpu.matmul %223, %9, %cst_59 {dimension_numbers = #tpu.dot_dimension_numbers<[1], [0], [0], [1], [0, 0, 1, 1], [], []>} : vector<8x32xbf16>, vector<32x96xbf16>, vector<8x96xf32> -> vector<8x96xf32>
    %225 = vector.broadcast %10 : vector<1x96xf32> to vector<8x96xf32>
    %226 = arith.addf %224, %225 : vector<8x96xf32>
    %227 = vector.extract_strided_slice %222 {offsets = [0, 0], sizes = [8, 32], strides = [1, 1]} : vector<8x96xf32> to vector<8x32xf32>
    %228 = vector.extract_strided_slice %226 {offsets = [0, 0], sizes = [8, 32], strides = [1, 1]} : vector<8x96xf32> to vector<8x32xf32>
    %229 = arith.addf %227, %228 : vector<8x32xf32>
    %cst_60 = arith.constant 5.000000e-01 : f32
    %230 = vector.broadcast %cst_60 : f32 to vector<8x32xf32>
    %231 = arith.mulf %230, %229 : vector<8x32xf32>
    %232 = math.tanh %231 : vector<8x32xf32>
    %cst_61 = arith.constant 1.000000e+00 : f32
    %233 = vector.broadcast %cst_61 : f32 to vector<8x32xf32>
    %234 = arith.addf %232, %233 : vector<8x32xf32>
    %cst_62 = arith.constant 5.000000e-01 : f32
    %235 = vector.broadcast %cst_62 : f32 to vector<8x32xf32>
    %236 = arith.mulf %235, %234 : vector<8x32xf32>
    %237 = vector.extract_strided_slice %222 {offsets = [0, 32], sizes = [8, 32], strides = [1, 1]} : vector<8x96xf32> to vector<8x32xf32>
    %238 = vector.extract_strided_slice %226 {offsets = [0, 32], sizes = [8, 32], strides = [1, 1]} : vector<8x96xf32> to vector<8x32xf32>
    %239 = arith.addf %237, %238 : vector<8x32xf32>
    %cst_63 = arith.constant 5.000000e-01 : f32
    %240 = vector.broadcast %cst_63 : f32 to vector<8x32xf32>
    %241 = arith.mulf %240, %239 : vector<8x32xf32>
    %242 = math.tanh %241 : vector<8x32xf32>
    %cst_64 = arith.constant 1.000000e+00 : f32
    %243 = vector.broadcast %cst_64 : f32 to vector<8x32xf32>
    %244 = arith.addf %242, %243 : vector<8x32xf32>
    %cst_65 = arith.constant 5.000000e-01 : f32
    %245 = vector.broadcast %cst_65 : f32 to vector<8x32xf32>
    %246 = arith.mulf %245, %244 : vector<8x32xf32>
    %247 = vector.extract_strided_slice %222 {offsets = [0, 64], sizes = [8, 32], strides = [1, 1]} : vector<8x96xf32> to vector<8x32xf32>
    %248 = vector.extract_strided_slice %226 {offsets = [0, 64], sizes = [8, 32], strides = [1, 1]} : vector<8x96xf32> to vector<8x32xf32>
    %249 = arith.mulf %236, %248 : vector<8x32xf32>
    %250 = arith.addf %247, %249 : vector<8x32xf32>
    %251 = math.tanh %250 : vector<8x32xf32>
    %cst_66 = arith.constant 1.000000e+00 : f32
    %252 = vector.broadcast %cst_66 : f32 to vector<8x32xf32>
    %253 = arith.subf %252, %246 : vector<8x32xf32>
    %254 = arith.mulf %253, %251 : vector<8x32xf32>
    %255 = arith.mulf %246, %221 : vector<8x32xf32>
    %256 = arith.addf %254, %255 : vector<8x32xf32>
    %257 = vector.extract_strided_slice %7 {offsets = [56, 0], sizes = [8, 96], strides = [1, 1]} : vector<64x96xf32> to vector<8x96xf32>
    %258 = arith.truncf %256 : vector<8x32xf32> to vector<8x32xbf16>
    %cst_67 = arith.constant dense<0.000000e+00> : vector<8x96xf32>
    %259 = tpu.matmul %258, %9, %cst_67 {dimension_numbers = #tpu.dot_dimension_numbers<[1], [0], [0], [1], [0, 0, 1, 1], [], []>} : vector<8x32xbf16>, vector<32x96xbf16>, vector<8x96xf32> -> vector<8x96xf32>
    %260 = vector.broadcast %10 : vector<1x96xf32> to vector<8x96xf32>
    %261 = arith.addf %259, %260 : vector<8x96xf32>
    %262 = vector.extract_strided_slice %257 {offsets = [0, 0], sizes = [8, 32], strides = [1, 1]} : vector<8x96xf32> to vector<8x32xf32>
    %263 = vector.extract_strided_slice %261 {offsets = [0, 0], sizes = [8, 32], strides = [1, 1]} : vector<8x96xf32> to vector<8x32xf32>
    %264 = arith.addf %262, %263 : vector<8x32xf32>
    %cst_68 = arith.constant 5.000000e-01 : f32
    %265 = vector.broadcast %cst_68 : f32 to vector<8x32xf32>
    %266 = arith.mulf %265, %264 : vector<8x32xf32>
    %267 = math.tanh %266 : vector<8x32xf32>
    %cst_69 = arith.constant 1.000000e+00 : f32
    %268 = vector.broadcast %cst_69 : f32 to vector<8x32xf32>
    %269 = arith.addf %267, %268 : vector<8x32xf32>
    %cst_70 = arith.constant 5.000000e-01 : f32
    %270 = vector.broadcast %cst_70 : f32 to vector<8x32xf32>
    %271 = arith.mulf %270, %269 : vector<8x32xf32>
    %272 = vector.extract_strided_slice %257 {offsets = [0, 32], sizes = [8, 32], strides = [1, 1]} : vector<8x96xf32> to vector<8x32xf32>
    %273 = vector.extract_strided_slice %261 {offsets = [0, 32], sizes = [8, 32], strides = [1, 1]} : vector<8x96xf32> to vector<8x32xf32>
    %274 = arith.addf %272, %273 : vector<8x32xf32>
    %cst_71 = arith.constant 5.000000e-01 : f32
    %275 = vector.broadcast %cst_71 : f32 to vector<8x32xf32>
    %276 = arith.mulf %275, %274 : vector<8x32xf32>
    %277 = math.tanh %276 : vector<8x32xf32>
    %cst_72 = arith.constant 1.000000e+00 : f32
    %278 = vector.broadcast %cst_72 : f32 to vector<8x32xf32>
    %279 = arith.addf %277, %278 : vector<8x32xf32>
    %cst_73 = arith.constant 5.000000e-01 : f32
    %280 = vector.broadcast %cst_73 : f32 to vector<8x32xf32>
    %281 = arith.mulf %280, %279 : vector<8x32xf32>
    %282 = vector.extract_strided_slice %257 {offsets = [0, 64], sizes = [8, 32], strides = [1, 1]} : vector<8x96xf32> to vector<8x32xf32>
    %283 = vector.extract_strided_slice %261 {offsets = [0, 64], sizes = [8, 32], strides = [1, 1]} : vector<8x96xf32> to vector<8x32xf32>
    %284 = arith.mulf %271, %283 : vector<8x32xf32>
    %285 = arith.addf %282, %284 : vector<8x32xf32>
    %286 = math.tanh %285 : vector<8x32xf32>
    %cst_74 = arith.constant 1.000000e+00 : f32
    %287 = vector.broadcast %cst_74 : f32 to vector<8x32xf32>
    %288 = arith.subf %287, %281 : vector<8x32xf32>
    %289 = arith.mulf %288, %286 : vector<8x32xf32>
    %290 = arith.mulf %281, %256 : vector<8x32xf32>
    %291 = arith.addf %289, %290 : vector<8x32xf32>
    %c0_75 = arith.constant 0 : index
    %c0_76 = arith.constant 0 : index
    %292 = vector.load %arg7[%c0_75, %c0_76] : memref<32x16xf32, #tpu.memory_space<vmem>>, vector<32x16xf32>
    %293 = arith.truncf %291 : vector<8x32xf32> to vector<8x32xbf16>
    %294 = arith.truncf %292 : vector<32x16xf32> to vector<32x16xbf16>
    %cst_77 = arith.constant dense<0.000000e+00> : vector<8x16xf32>
    %295 = tpu.matmul %293, %294, %cst_77 {dimension_numbers = #tpu.dot_dimension_numbers<[1], [0], [0], [1], [0, 0, 1, 1], [], []>} : vector<8x32xbf16>, vector<32x16xbf16>, vector<8x16xf32> -> vector<8x16xf32>
    %c0_78 = arith.constant 0 : index
    %c0_79 = arith.constant 0 : index
    %296 = vector.load %arg8[%c0_78, %c0_79] : memref<1x16xf32, #tpu.memory_space<vmem>>, vector<1x16xf32>
    %297 = vector.broadcast %296 : vector<1x16xf32> to vector<8x16xf32>
    %298 = arith.addf %295, %297 : vector<8x16xf32>
    %cst_80 = arith.constant dense<0xFF800000> : vector<16xf32>
    %299 = vector.multi_reduction <maximumf>, %298, %cst_80 [0] : vector<8x16xf32> to vector<16xf32>
    %300 = vector.shape_cast %299 : vector<16xf32> to vector<1x16xf32>
    %301 = vector.broadcast %300 : vector<1x16xf32> to vector<8x16xf32>
    %302 = arith.subf %298, %301 : vector<8x16xf32>
    %303 = math.exp %302 : vector<8x16xf32>
    %cst_81 = arith.constant dense<0.000000e+00> : vector<16xf32>
    %304 = vector.multi_reduction <add>, %303, %cst_81 [0] : vector<8x16xf32> to vector<16xf32>
    %305 = vector.shape_cast %304 : vector<16xf32> to vector<1x16xf32>
    %306 = tpu.reciprocal %305 {approx = true} : vector<1x16xf32> -> vector<1x16xf32>
    %307 = vector.broadcast %306 : vector<1x16xf32> to vector<8x16xf32>
    %308 = arith.mulf %303, %307 : vector<8x16xf32>
    %c0_82 = arith.constant 0 : index
    %c0_83 = arith.constant 0 : index
    %c0_84 = arith.constant 0 : index
    %309 = vector.load %arg2[%c0_82, %c0_83, %c0_84] : memref<1x1x8xf32, #tpu.memory_space<vmem>>, vector<1x1x8xf32>
    %310 = vector.shape_cast %309 : vector<1x1x8xf32> to vector<1x8xf32>
    %311 = arith.truncf %310 : vector<1x8xf32> to vector<1x8xbf16>
    %312 = arith.truncf %308 : vector<8x16xf32> to vector<8x16xbf16>
    %cst_85 = arith.constant dense<0.000000e+00> : vector<1x16xf32>
    %313 = tpu.matmul %311, %312, %cst_85 {dimension_numbers = #tpu.dot_dimension_numbers<[1], [0], [0], [1], [0, 0, 1, 1], [], []>} : vector<1x8xbf16>, vector<8x16xbf16>, vector<1x16xf32> -> vector<1x16xf32>
    %c0_86 = arith.constant 0 : index
    %c0_87 = arith.constant 0 : index
    %314 = vector.load %arg9[%c0_86, %c0_87] : memref<16x8xf32, #tpu.memory_space<vmem>>, vector<16x8xf32>
    %315 = arith.truncf %313 : vector<1x16xf32> to vector<1x16xbf16>
    %316 = arith.truncf %314 : vector<16x8xf32> to vector<16x8xbf16>
    %cst_88 = arith.constant dense<0.000000e+00> : vector<1x8xf32>
    %317 = tpu.matmul %315, %316, %cst_88 {dimension_numbers = #tpu.dot_dimension_numbers<[1], [0], [0], [1], [0, 0, 1, 1], [], []>} : vector<1x16xbf16>, vector<16x8xbf16>, vector<1x8xf32> -> vector<1x8xf32>
    %c0_89 = arith.constant 0 : index
    %c0_90 = arith.constant 0 : index
    %318 = vector.load %arg10[%c0_89, %c0_90] : memref<1x8xf32, #tpu.memory_space<vmem>>, vector<1x8xf32>
    %319 = arith.addf %317, %318 : vector<1x8xf32>
    %320 = tpu.transpose %291, [1, 0] : vector<8x32xf32> -> vector<32x8xf32>
    %c0_91 = arith.constant 0 : index
    %c0_92 = arith.constant 0 : index
    %321 = vector.load %arg11[%c0_91, %c0_92] : memref<40x32xf32, #tpu.memory_space<vmem>>, vector<40x32xf32>
    %322 = arith.truncf %321 : vector<40x32xf32> to vector<40x32xbf16>
    %323 = arith.truncf %320 : vector<32x8xf32> to vector<32x8xbf16>
    %cst_93 = arith.constant dense<0.000000e+00> : vector<40x8xf32>
    %324 = tpu.matmul %322, %323, %cst_93 {dimension_numbers = #tpu.dot_dimension_numbers<[1], [0], [0], [1], [0, 0, 1, 1], [], []>} : vector<40x32xbf16>, vector<32x8xbf16>, vector<40x8xf32> -> vector<40x8xf32>
    %c0_94 = arith.constant 0 : index
    %c0_95 = arith.constant 0 : index
    %325 = vector.load %arg12[%c0_94, %c0_95] : memref<40x1xf32, #tpu.memory_space<vmem>>, vector<40x1xf32>
    %326 = vector.broadcast %325 : vector<40x1xf32> to vector<40x8xf32>
    %327 = arith.addf %324, %326 : vector<40x8xf32>
    %328 = vector.extract_strided_slice %327 {offsets = [0, 0], sizes = [32, 8], strides = [1, 1]} : vector<40x8xf32> to vector<32x8xf32>
    %cst_96 = arith.constant 0.000000e+00 : f32
    %329 = vector.broadcast %cst_96 : f32 to vector<32x8xf32>
    %330 = arith.cmpf ogt, %328, %329 : vector<32x8xf32>
    %cst_97 = arith.constant 0.00999999977 : f32
    %331 = vector.broadcast %cst_97 : f32 to vector<32x8xf32>
    %332 = arith.mulf %331, %328 : vector<32x8xf32>
    %333 = arith.select %330, %328, %332 : vector<32x8xi1>, vector<32x8xf32>
    %334 = vector.extract_strided_slice %327 {offsets = [32, 0], sizes = [8, 8], strides = [1, 1]} : vector<40x8xf32> to vector<8x8xf32>
    %c0_98 = arith.constant 0 : index
    %c0_99 = arith.constant 0 : index
    %335 = vector.load %arg13[%c0_98, %c0_99] : memref<1x32xf32, #tpu.memory_space<vmem>>, vector<1x32xf32>
    %336 = arith.truncf %335 : vector<1x32xf32> to vector<1x32xbf16>
    %337 = arith.truncf %333 : vector<32x8xf32> to vector<32x8xbf16>
    %cst_100 = arith.constant dense<0.000000e+00> : vector<1x8xf32>
    %338 = tpu.matmul %336, %337, %cst_100 {dimension_numbers = #tpu.dot_dimension_numbers<[1], [0], [0], [1], [0, 0, 1, 1], [], []>} : vector<1x32xbf16>, vector<32x8xbf16>, vector<1x8xf32> -> vector<1x8xf32>
    %c0_101 = arith.constant 0 : index
    %c0_102 = arith.constant 0 : index
    %339 = vector.load %arg14[%c0_101, %c0_102] : memref<1x1xf32, #tpu.memory_space<vmem>>, vector<1x1xf32>
    %340 = vector.broadcast %339 : vector<1x1xf32> to vector<1x8xf32>
    %341 = arith.addf %338, %340 : vector<1x8xf32>
    %342 = arith.truncf %319 : vector<1x8xf32> to vector<1x8xbf16>
    %343 = arith.truncf %334 : vector<8x8xf32> to vector<8x8xbf16>
    %cst_103 = arith.constant dense<0.000000e+00> : vector<1x8xf32>
    %344 = tpu.matmul %342, %343, %cst_103 {dimension_numbers = #tpu.dot_dimension_numbers<[1], [0], [0], [1], [0, 0, 1, 1], [], []>} : vector<1x8xbf16>, vector<8x8xbf16>, vector<1x8xf32> -> vector<1x8xf32>
    %345 = arith.addf %341, %344 : vector<1x8xf32>
    %c0_104 = arith.constant 0 : index
    %c0_105 = arith.constant 0 : index
    %c0_106 = arith.constant 0 : index
    %346 = vector.load %arg15[%c0_104, %c0_105, %c0_106] : memref<1x1x8xf32, #tpu.memory_space<vmem>>, vector<1x1x8xf32>
    %347 = vector.shape_cast %346 : vector<1x1x8xf32> to vector<1x8xf32>
    %348 = vector.shape_cast %345 : vector<1x8xf32> to vector<1x1x8xf32>
    tpu.vector_store %arg15[%c0_104, %c0_105, %c0_106], %348 {strides = array<i32>} : memref<1x1x8xf32, #tpu.memory_space<vmem>>, vector<1x1x8xf32>,
    return
  }
  func.func @transform_0(%arg0: i32) -> (i32, i32, i32) {
    %c0_i32 = arith.constant 0 : i32
    %c0_i32_0 = arith.constant 0 : i32
    %c0_i32_1 = arith.constant 0 : i32
    return %arg0, %c0_i32, %c0_i32_0 : i32, i32, i32
  }
  func.func @transform_1(%arg0: i32) -> (i32, i32, i32) {
    %c0_i32 = arith.constant 0 : i32
    %c0_i32_0 = arith.constant 0 : i32
    %c0_i32_1 = arith.constant 0 : i32
    return %arg0, %c0_i32, %c0_i32_0 : i32, i32, i32
  }
  func.func @transform_2(%arg0: i32) -> (i32, i32) {
    %c0_i32 = arith.constant 0 : i32
    %c0_i32_0 = arith.constant 0 : i32
    %c0_i32_1 = arith.constant 0 : i32
    return %c0_i32, %c0_i32_0 : i32, i32
  }
  func.func @transform_3(%arg0: i32) -> (i32, i32) {
    %c0_i32 = arith.constant 0 : i32
    %c0_i32_0 = arith.constant 0 : i32
    %c0_i32_1 = arith.constant 0 : i32
    return %c0_i32, %c0_i32_0 : i32, i32
  }
  func.func @transform_4(%arg0: i32) -> (i32, i32) {
    %c0_i32 = arith.constant 0 : i32
    %c0_i32_0 = arith.constant 0 : i32
    %c0_i32_1 = arith.constant 0 : i32
    return %c0_i32, %c0_i32_0 : i32, i32
  }
  func.func @transform_5(%arg0: i32) -> (i32, i32) {
    %c0_i32 = arith.constant 0 : i32
    %c0_i32_0 = arith.constant 0 : i32
    %c0_i32_1 = arith.constant 0 : i32
    return %c0_i32, %c0_i32_0 : i32, i32
  }
  func.func @transform_6(%arg0: i32) -> (i32, i32) {
    %c0_i32 = arith.constant 0 : i32
    %c0_i32_0 = arith.constant 0 : i32
    %c0_i32_1 = arith.constant 0 : i32
    return %c0_i32, %c0_i32_0 : i32, i32
  }
  func.func @transform_7(%arg0: i32) -> (i32, i32) {
    %c0_i32 = arith.constant 0 : i32
    %c0_i32_0 = arith.constant 0 : i32
    %c0_i32_1 = arith.constant 0 : i32
    return %c0_i32, %c0_i32_0 : i32, i32
  }
  func.func @transform_8(%arg0: i32) -> (i32, i32) {
    %c0_i32 = arith.constant 0 : i32
    %c0_i32_0 = arith.constant 0 : i32
    %c0_i32_1 = arith.constant 0 : i32
    return %c0_i32, %c0_i32_0 : i32, i32
  }
  func.func @transform_9(%arg0: i32) -> (i32, i32) {
    %c0_i32 = arith.constant 0 : i32
    %c0_i32_0 = arith.constant 0 : i32
    %c0_i32_1 = arith.constant 0 : i32
    return %c0_i32, %c0_i32_0 : i32, i32
  }
  func.func @transform_10(%arg0: i32) -> (i32, i32) {
    %c0_i32 = arith.constant 0 : i32
    %c0_i32_0 = arith.constant 0 : i32
    %c0_i32_1 = arith.constant 0 : i32
    return %c0_i32, %c0_i32_0 : i32, i32
  }
  func.func @transform_11(%arg0: i32) -> (i32, i32) {
    %c0_i32 = arith.constant 0 : i32
    %c0_i32_0 = arith.constant 0 : i32
    %c0_i32_1 = arith.constant 0 : i32
    return %c0_i32, %c0_i32_0 : i32, i32
  }
  func.func @transform_12(%arg0: i32) -> (i32, i32) {
    %c0_i32 = arith.constant 0 : i32
    %c0_i32_0 = arith.constant 0 : i32
    %c0_i32_1 = arith.constant 0 : i32
    return %c0_i32, %c0_i32_0 : i32, i32
  }
  func.func @transform_13(%arg0: i32) -> (i32, i32) {
    %c0_i32 = arith.constant 0 : i32
    %c0_i32_0 = arith.constant 0 : i32
    %c0_i32_1 = arith.constant 0 : i32
    return %c0_i32, %c0_i32_0 : i32, i32
  }
  func.func @transform_14(%arg0: i32) -> (i32, i32, i32) {
    %c0_i32 = arith.constant 0 : i32
    %c0_i32_0 = arith.constant 0 : i32
    %c0_i32_1 = arith.constant 0 : i32
    return %arg0, %c0_i32, %c0_i32_0 : i32, i32, i32
  }
}

</mosaic_0001>

<llo_original>
// kernel: factorvae_forward_batched.1
$region0: #{factorvae_forward_batched.1}
  #allocation0 [shape = 'u32[]', space=smem, size = 0x4, offset = 0x4, fixed_abs, tag = 'smem constant byte address 0x4 - core index']
  #allocation1 [shape = 'u32[144,128]{1,0:T(1,128)}', space=vmem, size = 0x12000, scoped, tag = 'internal scratch']
  #allocation2 [shape = 'f32[1,1]{1,0:T(1,128)S(1)}', space=vmem, size = 0x200, scoped, tag = 'scoped memory for factorvae_forward_batched.1']
  %s0 = inlined_call_operand.hbm [shape: bf16[4,64,16], index: 0, kind: input, shape index: {}]
  %s1 = inlined_call_operand.hbm [shape: f32[4,1,8], index: 1, kind: input, shape index: {}]
  %s2 = inlined_call_operand.hbm [shape: f32[16,96], index: 2, kind: input, shape index: {}]
  %s3 = inlined_call_operand.hbm [shape: f32[1,96], index: 3, kind: input, shape index: {}]
  %s4 = inlined_call_operand.hbm [shape: f32[32,96], index: 4, kind: input, shape index: {}]
  %s5 = inlined_call_operand.hbm [shape: f32[1,96], index: 5, kind: input, shape index: {}]
  %s6 = inlined_call_operand.hbm [shape: f32[32,16], index: 6, kind: input, shape index: {}]
  %s7 = inlined_call_operand.hbm [shape: f32[1,16], index: 7, kind: input, shape index: {}]
  %s8 = inlined_call_operand.hbm [shape: f32[16,8], index: 8, kind: input, shape index: {}]
  %s9 = inlined_call_operand.hbm [shape: f32[1,8], index: 9, kind: input, shape index: {}]
  %s10 = inlined_call_operand.hbm [shape: f32[40,32], index: 10, kind: input, shape index: {}]
  %s11 = inlined_call_operand.hbm [shape: f32[40,1], index: 11, kind: input, shape index: {}]
  %s12 = inlined_call_operand.hbm [shape: f32[1,32], index: 12, kind: input, shape index: {}]
  %s13 = inlined_call_operand.<no memory space> [shape: f32[1,1], index: 13, kind: input, shape index: {}]
  %s14 = inlined_call_operand.hbm [shape: f32[4,1,8], index: 14, kind: output, shape index: {}]
  %s15 = sld [smem:[#allocation0]]
  $region141: #{factorvae_forward_batched.1} parent=0
    _
  %s17 = ssub.s32 1, %s15
  %s18 = scalar_select 0, %s17, %s15
  %v19 = vstv %s13
  %20 = vst [vmem:[#allocation2] sm:$0x1] %v19
  $region1: #{factorvae_forward_batched.1} parent=0
    #allocation3 [shape = 'u8[32768]{0}', space=vmem, size = 0x8000, scoped, tag = 'input window, operand 0']
    #allocation4 [shape = 's32[2]{0}', space=sflag, size = 0x8, scoped, tag = 'scoped memory for factorvae_forward_batched.1']
    #allocation5 [shape = 's32[2]{0}', space=sflag, size = 0x8, scoped, tag = 'scoped memory for factorvae_forward_batched.1']
    #allocation6 [shape = 'u8[1024]{0}', space=vmem, size = 0x400, scoped, tag = 'input window, operand 1']
    #allocation7 [shape = 's32[2]{0}', space=sflag, size = 0x8, scoped, tag = 'scoped memory for factorvae_forward_batched.1']
    #allocation8 [shape = 'u8[8192]{0}', space=vmem, size = 0x2000, scoped, tag = 'input window, operand 2, single buffered']
    #allocation9 [shape = 'u8[512]{0}', space=vmem, size = 0x400, scoped, tag = 'input window, operand 3, single buffered']
    #allocation10 [shape = 's32[1]{0}', space=sflag, size = 0x4, scoped, tag = 'scoped memory for factorvae_forward_batched.1']
    #allocation11 [shape = 'u8[16384]{0}', space=vmem, size = 0x4000, scoped, tag = 'input window, operand 4, single buffered']
    #allocation12 [shape = 'u8[512]{0}', space=vmem, size = 0x400, scoped, tag = 'input window, operand 5, single buffered']
    #allocation13 [shape = 's32[1]{0}', space=sflag, size = 0x4, scoped, tag = 'scoped memory for factorvae_forward_batched.1']
    #allocation14 [shape = 'u8[16384]{0}', space=vmem, size = 0x4000, scoped, tag = 'input window, operand 6, single buffered']
    #allocation15 [shape = 'u8[512]{0}', space=vmem, size = 0x400, scoped, tag = 'input window, operand 7, single buffered']
    #allocation16 [shape = 's32[1]{0}', space=sflag, size = 0x4, scoped, tag = 'scoped memory for factorvae_forward_batched.1']
    #allocation17 [shape = 'u8[8192]{0}', space=vmem, size = 0x2000, scoped, tag = 'input window, operand 8, single buffered']
    #allocation18 [shape = 'u8[512]{0}', space=vmem, size = 0x400, scoped, tag = 'input window, operand 9, single buffered']
    #allocation19 [shape = 's32[1]{0}', space=sflag, size = 0x4, scoped, tag = 'scoped memory for factorvae_forward_batched.1']
    #allocation20 [shape = 'u8[20480]{0}', space=vmem, size = 0x5000, scoped, tag = 'input window, operand 10, single buffered']
    #allocation21 [shape = 'u8[20480]{0}', space=vmem, size = 0x5000, scoped, tag = 'input window, operand 11, single buffered']
    #allocation22 [shape = 's32[1]{0}', space=sflag, size = 0x4, scoped, tag = 'scoped memory for factorvae_forward_batched.1']
    #allocation23 [shape = 'u8[512]{0}', space=vmem, size = 0x400, scoped, tag = 'input window, operand 12, single buffered']
    #allocation24 [shape = 'u8[1024]{0}', space=vmem, size = 0x400, scoped, tag = 'output window, operand 0']
    %21 = vsyncpa [#allocation4], 0
    %s22 = scalar_lea.sflag [#allocation4], 1
    %23 = vsyncpa %s22, 0
    %24 = vsyncpa [#allocation7], 0
    %s25 = scalar_lea.sflag [#allocation7], 1
    %26 = vsyncpa %s25, 0
    %27 = vsyncpa [#allocation10], 0
    %28 = vsyncpa [#allocation13], 0
    %29 = vsyncpa [#allocation16], 0
    %30 = vsyncpa [#allocation19], 0
    %31 = vsyncpa [#allocation22], 0
    %32 = vsyncpa [#allocation5], 0
    %s33 = scalar_lea.sflag [#allocation5], 1
    %34 = vsyncpa %s33, 0
    loop: start=0, step=1, limit=6
    $region2: #{factorvae_forward_batched.1} parent=1 // loop_pre_header
      _
    $region3: #{factorvae_forward_batched.1} parent=1 // loop_header
      %s36 = sphi 0, %s40
      %p37 = scmp.ge.s32.totalorder %s36, 6
      %s46 = sphi 0, %s48
      %s49 = sphi 0, %s46
      %s50 = sphi 0, %s49
      %s66 = sphi 0, %s50
      %s72 = sphi 0, %s74
      %s75 = sphi 0, %s72
      %s76 = sphi 0, %s75
      %s92 = sphi 0, %s76
      %s96 = sphi 0, %s96
      %s98 = sphi 0, %s96
      %s99 = sphi 0, %s98
      %s113 = sphi 0, %s99
      %s117 = sphi 0, %s117
      %s119 = sphi 0, %s117
      %s120 = sphi 0, %s119
      %s134 = sphi 0, %s120
      %s138 = sphi 0, %s138
      %s140 = sphi 0, %s138
      %s141 = sphi 0, %s140
      %s155 = sphi 0, %s141
      %s159 = sphi 0, %s159
      %s161 = sphi 0, %s159
      %s162 = sphi 0, %s161
      %s176 = sphi 0, %s162
      %s180 = sphi 0, %s180
      %s182 = sphi 0, %s180
      %s183 = sphi 0, %s182
      %s197 = sphi 0, %s183
      %s201 = sphi 0, %s201
      %s203 = sphi 0, %s201
      %s204 = sphi 0, %s203
      %s218 = sphi 0, %s204
      %s222 = sphi 0, %s222
      %s224 = sphi 0, %s222
      %s225 = sphi 0, %s224
      %s239 = sphi 0, %s225
      %s243 = sphi 0, %s243
      %s245 = sphi 0, %s243
      %s246 = sphi 0, %s245
      %s260 = sphi 0, %s246
      %s264 = sphi 0, %s264
      %s266 = sphi 0, %s264
      %s267 = sphi 0, %s266
      %s281 = sphi 0, %s267
      %s285 = sphi 0, %s285
      %s287 = sphi 0, %s285
      %s288 = sphi 0, %s287
      %s302 = sphi 0, %s288
      %s306 = sphi 0, %s306
      %s308 = sphi 0, %s306
      %s309 = sphi 0, %s308
      %s323 = sphi 0, %s309
      %s327 = sphi 0, %s327
      %s329 = sphi 0, %s327
      %s330 = sphi 0, %s329
      %s344 = sphi 0, %s330
      %s350 = sphi 0, %s352
      %s353 = sphi 0, %s350
      %s354 = sphi 0, %s353
      %s370 = sphi 0, %s354
    $region4: #{factorvae_forward_batched.1} parent=1 // loop_header_branch
      %39 = sbr.rel (%p37) target = $region8
    $region5: #{factorvae_forward_batched.1} parent=1 // loop_body
      %s41 = ssub.s32 %s36, 1
      %s42 = ssub.s32 %s36, 2
      %s43 = sadd.s32 %s36, 1
      %s44 = ssub.s32 %s36, %s43
      %p45 = scmp.eq.s32.totalorder %s44, 0
      %s47 = sadd.s32 %s46, 1
      %s48 = scalar_select %p45, %s46, %s47
      %p51 = pneg %p45
      %p52 = scmp.eq.s32.totalorder %s36, 3
      %p53 = por %p51, %p52
      %p54 = scmp.ne.s32.totalorder %s46, %s49
      %p55 = scmp.eq.s32.totalorder %s36, 0
      %p56 = por %p54, %p55
      %p57 = scmp.ne.s32.totalorder %s46, %s49
      %p58 = scmp.eq.s32.totalorder %s41, 3
      %p59 = por %p57, %p58
      %p60 = scmp.ne.s32.totalorder %s49, %s50
      %p61 = scmp.eq.s32.totalorder %s41, 0
      %p62 = por %p60, %p61
      %p63 = scmp.ne.s32.totalorder %s49, %s50
      %p64 = scmp.eq.s32.totalorder %s42, 3
      %p65 = por %p63, %p64
      %p67 = scmp.ne.s32.totalorder %s50, %s66
      %p68 = scmp.eq.s32.totalorder %s42, 0
      %p69 = por %p67, %p68
      %s70 = ssub.s32 %s36, %s43
      %p71 = scmp.eq.s32.totalorder %s70, 0
      %s73 = sadd.s32 %s72, 1
      %s74 = scalar_select %p71, %s72, %s73
      %p77 = pneg %p71
      %p78 = scmp.eq.s32.totalorder %s36, 3
      %p79 = por %p77, %p78
      %p80 = scmp.ne.s32.totalorder %s72, %s75
      %p81 = scmp.eq.s32.totalorder %s36, 0
      %p82 = por %p80, %p81
      %p83 = scmp.ne.s32.totalorder %s72, %s75
      %p84 = scmp.eq.s32.totalorder %s41, 3
      %p85 = por %p83, %p84
      %p86 = scmp.ne.s32.totalorder %s75, %s76
      %p87 = scmp.eq.s32.totalorder %s41, 0
      %p88 = por %p86, %p87
      %p89 = scmp.ne.s32.totalorder %s75, %s76
      %p90 = scmp.eq.s32.totalorder %s42, 3
      %p91 = por %p89, %p90
      %p93 = scmp.ne.s32.totalorder %s76, %s92
      %p94 = scmp.eq.s32.totalorder %s42, 0
      %p95 = por %p93, %p94
      %s97 = sadd.s32 %s96, 1
      %p100 = scmp.eq.s32.totalorder %s36, 3
      %p101 = scmp.ne.s32.totalorder %s96, %s98
      %p102 = scmp.eq.s32.totalorder %s36, 0
      %p103 = por %p101, %p102
      %p104 = scmp.ne.s32.totalorder %s96, %s98
      %p105 = scmp.eq.s32.totalorder %s41, 3
      %p106 = por %p104, %p105
      %p107 = scmp.ne.s32.totalorder %s98, %s99
      %p108 = scmp.eq.s32.totalorder %s41, 0
      %p109 = por %p107, %p108
      %p110 = scmp.ne.s32.totalorder %s98, %s99
      %p111 = scmp.eq.s32.totalorder %s42, 3
      %p112 = por %p110, %p111
      %p114 = scmp.ne.s32.totalorder %s99, %s113
      %p115 = scmp.eq.s32.totalorder %s42, 0
      %p116 = por %p114, %p115
      %s118 = sadd.s32 %s117, 1
      %p121 = scmp.eq.s32.totalorder %s36, 3
      %p122 = scmp.ne.s32.totalorder %s117, %s119
      %p123 = scmp.eq.s32.totalorder %s36, 0
      %p124 = por %p122, %p123
      %p125 = scmp.ne.s32.totalorder %s117, %s119
      %p126 = scmp.eq.s32.totalorder %s41, 3
      %p127 = por %p125, %p126
      %p128 = scmp.ne.s32.totalorder %s119, %s120
      %p129 = scmp.eq.s32.totalorder %s41, 0
      %p130 = por %p128, %p129
      %p131 = scmp.ne.s32.totalorder %s119, %s120
      %p132 = scmp.eq.s32.totalorder %s42, 3
      %p133 = por %p131, %p132
      %p135 = scmp.ne.s32.totalorder %s120, %s134
      %p136 = scmp.eq.s32.totalorder %s42, 0
      %p137 = por %p135, %p136
      %s139 = sadd.s32 %s138, 1
      %p142 = scmp.eq.s32.totalorder %s36, 3
      %p143 = scmp.ne.s32.totalorder %s138, %s140
      %p144 = scmp.eq.s32.totalorder %s36, 0
      %p145 = por %p143, %p144
      %p146 = scmp.ne.s32.totalorder %s138, %s140
      %p147 = scmp.eq.s32.totalorder %s41, 3
      %p148 = por %p146, %p147
      %p149 = scmp.ne.s32.totalorder %s140, %s141
      %p150 = scmp.eq.s32.totalorder %s41, 0
      %p151 = por %p149, %p150
      %p152 = scmp.ne.s32.totalorder %s140, %s141
      %p153 = scmp.eq.s32.totalorder %s42, 3
      %p154 = por %p152, %p153
      %p156 = scmp.ne.s32.totalorder %s141, %s155
      %p157 = scmp.eq.s32.totalorder %s42, 0
      %p158 = por %p156, %p157
      %s160 = sadd.s32 %s159, 1
      %p163 = scmp.eq.s32.totalorder %s36, 3
      %p164 = scmp.ne.s32.totalorder %s159, %s161
      %p165 = scmp.eq.s32.totalorder %s36, 0
      %p166 = por %p164, %p165
      %p167 = scmp.ne.s32.totalorder %s159, %s161
      %p168 = scmp.eq.s32.totalorder %s41, 3
      %p169 = por %p167, %p168
      %p170 = scmp.ne.s32.totalorder %s161, %s162
      %p171 = scmp.eq.s32.totalorder %s41, 0
      %p172 = por %p170, %p171
      %p173 = scmp.ne.s32.totalorder %s161, %s162
      %p174 = scmp.eq.s32.totalorder %s42, 3
      %p175 = por %p173, %p174
      %p177 = scmp.ne.s32.totalorder %s162, %s176
      %p178 = scmp.eq.s32.totalorder %s42, 0
      %p179 = por %p177, %p178
      %s181 = sadd.s32 %s180, 1
      %p184 = scmp.eq.s32.totalorder %s36, 3
      %p185 = scmp.ne.s32.totalorder %s180, %s182
      %p186 = scmp.eq.s32.totalorder %s36, 0
      %p187 = por %p185, %p186
      %p188 = scmp.ne.s32.totalorder %s180, %s182
      %p189 = scmp.eq.s32.totalorder %s41, 3
      %p190 = por %p188, %p189
      %p191 = scmp.ne.s32.totalorder %s182, %s183
      %p192 = scmp.eq.s32.totalorder %s41, 0
      %p193 = por %p191, %p192
      %p194 = scmp.ne.s32.totalorder %s182, %s183
      %p195 = scmp.eq.s32.totalorder %s42, 3
      %p196 = por %p194, %p195
      %p198 = scmp.ne.s32.totalorder %s183, %s197
      %p199 = scmp.eq.s32.totalorder %s42, 0
      %p200 = por %p198, %p199
      %s202 = sadd.s32 %s201, 1
      %p205 = scmp.eq.s32.totalorder %s36, 3
      %p206 = scmp.ne.s32.totalorder %s201, %s203
      %p207 = scmp.eq.s32.totalorder %s36, 0
      %p208 = por %p206, %p207
      %p209 = scmp.ne.s32.totalorder %s201, %s203
      %p210 = scmp.eq.s32.totalorder %s41, 3
      %p211 = por %p209, %p210
      %p212 = scmp.ne.s32.totalorder %s203, %s204
      %p213 = scmp.eq.s32.totalorder %s41, 0
      %p214 = por %p212, %p213
      %p215 = scmp.ne.s32.totalorder %s203, %s204
      %p216 = scmp.eq.s32.totalorder %s42, 3
      %p217 = por %p215, %p216
      %p219 = scmp.ne.s32.totalorder %s204, %s218
      %p220 = scmp.eq.s32.totalorder %s42, 0
      %p221 = por %p219, %p220
      %s223 = sadd.s32 %s222, 1
      %p226 = scmp.eq.s32.totalorder %s36, 3
      %p227 = scmp.ne.s32.totalorder %s222, %s224
      %p228 = scmp.eq.s32.totalorder %s36, 0
      %p229 = por %p227, %p228
      %p230 = scmp.ne.s32.totalorder %s222, %s224
      %p231 = scmp.eq.s32.totalorder %s41, 3
      %p232 = por %p230, %p231
      %p233 = scmp.ne.s32.totalorder %s224, %s225
      %p234 = scmp.eq.s32.totalorder %s41, 0
      %p235 = por %p233, %p234
      %p236 = scmp.ne.s32.totalorder %s224, %s225
      %p237 = scmp.eq.s32.totalorder %s42, 3
      %p238 = por %p236, %p237
      %p240 = scmp.ne.s32.totalorder %s225, %s239
      %p241 = scmp.eq.s32.totalorder %s42, 0
      %p242 = por %p240, %p241
      %s244 = sadd.s32 %s243, 1
      %p247 = scmp.eq.s32.totalorder %s36, 3
      %p248 = scmp.ne.s32.totalorder %s243, %s245
      %p249 = scmp.eq.s32.totalorder %s36, 0
      %p250 = por %p248, %p249
      %p251 = scmp.ne.s32.totalorder %s243, %s245
      %p252 = scmp.eq.s32.totalorder %s41, 3
      %p253 = por %p251, %p252
      %p254 = scmp.ne.s32.totalorder %s245, %s246
      %p255 = scmp.eq.s32.totalorder %s41, 0
      %p256 = por %p254, %p255
      %p257 = scmp.ne.s32.totalorder %s245, %s246
      %p258 = scmp.eq.s32.totalorder %s42, 3
      %p259 = por %p257, %p258
      %p261 = scmp.ne.s32.totalorder %s246, %s260
      %p262 = scmp.eq.s32.totalorder %s42, 0
      %p263 = por %p261, %p262
      %s265 = sadd.s32 %s264, 1
      %p268 = scmp.eq.s32.totalorder %s36, 3
      %p269 = scmp.ne.s32.totalorder %s264, %s266
      %p270 = scmp.eq.s32.totalorder %s36, 0
      %p271 = por %p269, %p270
      %p272 = scmp.ne.s32.totalorder %s264, %s266
      %p273 = scmp.eq.s32.totalorder %s41, 3
      %p274 = por %p272, %p273
      %p275 = scmp.ne.s32.totalorder %s266, %s267
      %p276 = scmp.eq.s32.totalorder %s41, 0
      %p277 = por %p275, %p276
      %p278 = scmp.ne.s32.totalorder %s266, %s267
      %p279 = scmp.eq.s32.totalorder %s42, 3
      %p280 = por %p278, %p279
      %p282 = scmp.ne.s32.totalorder %s267, %s281
      %p283 = scmp.eq.s32.totalorder %s42, 0
      %p284 = por %p282, %p283
      %s286 = sadd.s32 %s285, 1
      %p289 = scmp.eq.s32.totalorder %s36, 3
      %p290 = scmp.ne.s32.totalorder %s285, %s287
      %p291 = scmp.eq.s32.totalorder %s36, 0
      %p292 = por %p290, %p291
      %p293 = scmp.ne.s32.totalorder %s285, %s287
      %p294 = scmp.eq.s32.totalorder %s41, 3
      %p295 = por %p293, %p294
      %p296 = scmp.ne.s32.totalorder %s287, %s288
      %p297 = scmp.eq.s32.totalorder %s41, 0
      %p298 = por %p296, %p297
      %p299 = scmp.ne.s32.totalorder %s287, %s288
      %p300 = scmp.eq.s32.totalorder %s42, 3
      %p301 = por %p299, %p300
      %p303 = scmp.ne.s32.totalorder %s288, %s302
      %p304 = scmp.eq.s32.totalorder %s42, 0
      %p305 = por %p303, %p304
      %s307 = sadd.s32 %s306, 1
      %p310 = scmp.eq.s32.totalorder %s36, 3
      %p311 = scmp.ne.s32.totalorder %s306, %s308
      %p312 = scmp.eq.s32.totalorder %s36, 0
      %p313 = por %p311, %p312
      %p314 = scmp.ne.s32.totalorder %s306, %s308
      %p315 = scmp.eq.s32.totalorder %s41, 3
      %p316 = por %p314, %p315
      %p317 = scmp.ne.s32.totalorder %s308, %s309
      %p318 = scmp.eq.s32.totalorder %s41, 0
      %p319 = por %p317, %p318
      %p320 = scmp.ne.s32.totalorder %s308, %s309
      %p321 = scmp.eq.s32.totalorder %s42, 3
      %p322 = por %p320, %p321
      %p324 = scmp.ne.s32.totalorder %s309, %s323
      %p325 = scmp.eq.s32.totalorder %s42, 0
      %p326 = por %p324, %p325
      %s328 = sadd.s32 %s327, 1
      %p331 = scmp.eq.s32.totalorder %s36, 3
      %p332 = scmp.ne.s32.totalorder %s327, %s329
      %p333 = scmp.eq.s32.totalorder %s36, 0
      %p334 = por %p332, %p333
      %p335 = scmp.ne.s32.totalorder %s327, %s329
      %p336 = scmp.eq.s32.totalorder %s41, 3
      %p337 = por %p335, %p336
      %p338 = scmp.ne.s32.totalorder %s329, %s330
      %p339 = scmp.eq.s32.totalorder %s41, 0
      %p340 = por %p338, %p339
      %p341 = scmp.ne.s32.totalorder %s329, %s330
      %p342 = scmp.eq.s32.totalorder %s42, 3
      %p343 = por %p341, %p342
      %p345 = scmp.ne.s32.totalorder %s330, %s344
      %p346 = scmp.eq.s32.totalorder %s42, 0
      %p347 = por %p345, %p346
      %s348 = ssub.s32 %s36, %s43
      %p349 = scmp.eq.s32.totalorder %s348, 0
      %s351 = sadd.s32 %s350, 1
      %s352 = scalar_select %p349, %s350, %s351
      %p355 = pneg %p349
      %p356 = scmp.eq.s32.totalorder %s36, 3
      %p357 = por %p355, %p356
      %p358 = scmp.ne.s32.totalorder %s350, %s353
      %p359 = scmp.eq.s32.totalorder %s36, 0
      %p360 = por %p358, %p359
      %p361 = scmp.ne.s32.totalorder %s350, %s353
      %p362 = scmp.eq.s32.totalorder %s41, 3
      %p363 = por %p361, %p362
      %p364 = scmp.ne.s32.totalorder %s353, %s354
      %p365 = scmp.eq.s32.totalorder %s41, 0
      %p366 = por %p364, %p365
      %p367 = scmp.ne.s32.totalorder %s353, %s354
      %p368 = scmp.eq.s32.totalorder %s42, 3
      %p369 = por %p367, %p368
      %p371 = scmp.ne.s32.totalorder %s354, %s370
      %p372 = scmp.eq.s32.totalorder %s42, 0
      %p373 = por %p371, %p372
      %p374 = scmp.le.s32.totalorder 1, %s36
      %p375 = scmp.lt.s32.totalorder %s36, 5
      %p376 = pnand %p374, %p375
      %p377 = pneg %p376
      // Predicated region
      $region9: #{factorvae_forward_batched.1} parent=5 // pred_check
        _
      $region10: #{factorvae_forward_batched.1} parent=5 // pred_check_branch
        %379 = sbr.rel (%p376) target = $region12
      $region11: #{factorvae_forward_batched.1} parent=5 // pred_region
        %s380 = ssub.s32 %s36, 1
        // Predicated region
        $region13: #{factorvae_forward_batched.1} parent=11 // pred_check
          %p381 = pneg %p109
        $region14: #{factorvae_forward_batched.1} parent=11 // pred_check_branch
          %383 = sbr.rel (%p381) target = $region16
        $region15: #{factorvae_forward_batched.1} parent=11 // pred_region
          %s385 = ssub.s32 256, 256
          %386 = vsyncadd [#allocation7], %s385
          %s387 = sshll.u32 [#allocation8], 4
          %s388 = int_to_ptr.vmem [resolvable:$true] %s387
          %393 = dma.hbm_to_vmem [thread:$0]  %s2, 256, %s388, [#allocation7], 128, 128, 8
        $region16: #{factorvae_forward_batched.1} parent=11 // pred_fallthru
          _
        // Predicated region
        $region17: #{factorvae_forward_batched.1} parent=11 // pred_check
          %p394 = pneg %p130
        $region18: #{factorvae_forward_batched.1} parent=11 // pred_check_branch
          %396 = sbr.rel (%p394) target = $region20
        $region19: #{factorvae_forward_batched.1} parent=11 // pred_region
          %s398 = ssub.s32 16, 16
          %399 = vsyncadd [#allocation10], %s398
          %s401 = sshll.u32 [#allocation9], 4
          %s402 = int_to_ptr.vmem [resolvable:$true] %s401
          %404 = dma.hbm_to_vmem [thread:$0]  %s3, 16, %s402, [#allocation10]
        $region20: #{factorvae_forward_batched.1} parent=11 // pred_fallthru
          _
        // Predicated region
        $region21: #{factorvae_forward_batched.1} parent=11 // pred_check
          %p405 = pneg %p151
        $region22: #{factorvae_forward_batched.1} parent=11 // pred_check_branch
          %407 = sbr.rel (%p405) target = $region24
        $region23: #{factorvae_forward_batched.1} parent=11 // pred_region
          %s409 = ssub.s32 512, 512
          %410 = vsyncadd [#allocation10], %s409
          %s411 = sshll.u32 [#allocation11], 4
          %s412 = int_to_ptr.vmem [resolvable:$true] %s411
          %417 = dma.hbm_to_vmem [thread:$0]  %s4, 512, %s412, [#allocation10], 128, 128, 8
        $region24: #{factorvae_forward_batched.1} parent=11 // pred_fallthru
          _
        // Predicated region
        $region25: #{factorvae_forward_batched.1} parent=11 // pred_check
          %p418 = pneg %p172
        $region26: #{factorvae_forward_batched.1} parent=11 // pred_check_branch
          %420 = sbr.rel (%p418) target = $region28
        $region27: #{factorvae_forward_batched.1} parent=11 // pred_region
          %s422 = ssub.s32 16, 16
          %423 = vsyncadd [#allocation13], %s422
          %s425 = sshll.u32 [#allocation12], 4
          %s426 = int_to_ptr.vmem [resolvable:$true] %s425
          %428 = dma.hbm_to_vmem [thread:$0]  %s5, 16, %s426, [#allocation13]
        $region28: #{factorvae_forward_batched.1} parent=11 // pred_fallthru
          _
        // Predicated region
        $region29: #{factorvae_forward_batched.1} parent=11 // pred_check
          %p429 = pneg %p193
        $region30: #{factorvae_forward_batched.1} parent=11 // pred_check_branch
          %431 = sbr.rel (%p429) target = $region32
        $region31: #{factorvae_forward_batched.1} parent=11 // pred_region
          %s433 = ssub.s32 512, 512
          %434 = vsyncadd [#allocation13], %s433
          %s435 = sshll.u32 [#allocation14], 4
          %s436 = int_to_ptr.vmem [resolvable:$true] %s435
          %441 = dma.hbm_to_vmem [thread:$0]  %s6, 512, %s436, [#allocation13], 128, 128, 8
        $region32: #{factorvae_forward_batched.1} parent=11 // pred_fallthru
          _
        // Predicated region
        $region33: #{factorvae_forward_batched.1} parent=11 // pred_check
          %p442 = pneg %p214
        $region34: #{factorvae_forward_batched.1} parent=11 // pred_check_branch
          %444 = sbr.rel (%p442) target = $region36
        $region35: #{factorvae_forward_batched.1} parent=11 // pred_region
          %s446 = ssub.s32 16, 16
          %447 = vsyncadd [#allocation16], %s446
          %s449 = sshll.u32 [#allocation15], 4
          %s450 = int_to_ptr.vmem [resolvable:$true] %s449
          %452 = dma.hbm_to_vmem [thread:$0]  %s7, 16, %s450, [#allocation16]
        $region36: #{factorvae_forward_batched.1} parent=11 // pred_fallthru
          _
        // Predicated region
        $region37: #{factorvae_forward_batched.1} parent=11 // pred_check
          %p453 = pneg %p235
        $region38: #{factorvae_forward_batched.1} parent=11 // pred_check_branch
          %455 = sbr.rel (%p453) target = $region40
        $region39: #{factorvae_forward_batched.1} parent=11 // pred_region
          %s457 = ssub.s32 256, 256
          %458 = vsyncadd [#allocation16], %s457
          %s459 = sshll.u32 [#allocation17], 4
          %s460 = int_to_ptr.vmem [resolvable:$true] %s459
          %465 = dma.hbm_to_vmem [thread:$0]  %s8, 256, %s460, [#allocation16], 128, 128, 8
        $region40: #{factorvae_forward_batched.1} parent=11 // pred_fallthru
          _
        // Predicated region
        $region41: #{factorvae_forward_batched.1} parent=11 // pred_check
          %p466 = pneg %p256
        $region42: #{factorvae_forward_batched.1} parent=11 // pred_check_branch
          %468 = sbr.rel (%p466) target = $region44
        $region43: #{factorvae_forward_batched.1} parent=11 // pred_region
          %s470 = ssub.s32 16, 16
          %471 = vsyncadd [#allocation19], %s470
          %s473 = sshll.u32 [#allocation18], 4
          %s474 = int_to_ptr.vmem [resolvable:$true] %s473
          %476 = dma.hbm_to_vmem [thread:$0]  %s9, 16, %s474, [#allocation19]
        $region44: #{factorvae_forward_batched.1} parent=11 // pred_fallthru
          _
        // Predicated region
        $region45: #{factorvae_forward_batched.1} parent=11 // pred_check
          %p477 = pneg %p277
        $region46: #{factorvae_forward_batched.1} parent=11 // pred_check_branch
          %479 = sbr.rel (%p477) target = $region48
        $region47: #{factorvae_forward_batched.1} parent=11 // pred_region
          %s481 = ssub.s32 640, 640
          %482 = vsyncadd [#allocation19], %s481
          %s483 = sshll.u32 [#allocation20], 4
          %s484 = int_to_ptr.vmem [resolvable:$true] %s483
          %489 = dma.hbm_to_vmem [thread:$0]  %s10, 640, %s484, [#allocation19], 128, 128, 8
        $region48: #{factorvae_forward_batched.1} parent=11 // pred_fallthru
          _
        // Predicated region
        $region49: #{factorvae_forward_batched.1} parent=11 // pred_check
          %p490 = pneg %p298
        $region50: #{factorvae_forward_batched.1} parent=11 // pred_check_branch
          %492 = sbr.rel (%p490) target = $region52
        $region51: #{factorvae_forward_batched.1} parent=11 // pred_region
          %s494 = ssub.s32 640, 640
          %495 = vsyncadd [#allocation22], %s494
          %s496 = sshll.u32 [#allocation21], 4
          %s497 = int_to_ptr.vmem [resolvable:$true] %s496
          %502 = dma.hbm_to_vmem [thread:$0]  %s11, 640, %s497, [#allocation22], 128, 128, 8
        $region52: #{factorvae_forward_batched.1} parent=11 // pred_fallthru
          _
        // Predicated region
        $region53: #{factorvae_forward_batched.1} parent=11 // pred_check
          %p503 = pneg %p319
        $region54: #{factorvae_forward_batched.1} parent=11 // pred_check_branch
          %505 = sbr.rel (%p503) target = $region56
        $region55: #{factorvae_forward_batched.1} parent=11 // pred_region
          %s507 = ssub.s32 16, 16
          %508 = vsyncadd [#allocation22], %s507
          %s510 = sshll.u32 [#allocation23], 4
          %s511 = int_to_ptr.vmem [resolvable:$true] %s510
          %513 = dma.hbm_to_vmem [thread:$0]  %s12, 16, %s511, [#allocation22]
        $region56: #{factorvae_forward_batched.1} parent=11 // pred_fallthru
          _
        // Predicated region
        $region57: #{factorvae_forward_batched.1} parent=11 // pred_check
          %p514 = pneg %p340
        $region58: #{factorvae_forward_batched.1} parent=11 // pred_check_branch
          %516 = sbr.rel (%p514) target = $region60
        $region59: #{factorvae_forward_batched.1} parent=11 // pred_region
          _
        $region60: #{factorvae_forward_batched.1} parent=11 // pred_fallthru
          _
      $region12: #{factorvae_forward_batched.1} parent=5 // pred_fallthru
        _
      %p517 = scmp.lt.s32.totalorder %s36, 4
      // Predicated region
      $region61: #{factorvae_forward_batched.1} parent=5 // pred_check
        %p518 = pneg %p517
      $region62: #{factorvae_forward_batched.1} parent=5 // pred_check_branch
        %520 = sbr.rel (%p518) target = $region64
      $region63: #{factorvae_forward_batched.1} parent=5 // pred_region
        // Predicated region
        $region65: #{factorvae_forward_batched.1} parent=63 // pred_check
          %p521 = pneg %p56
        $region66: #{factorvae_forward_batched.1} parent=63 // pred_check_branch
          %523 = sbr.rel (%p521) target = $region68
        $region67: #{factorvae_forward_batched.1} parent=63 // pred_region
          %s524 = sand.u32 %s46, 1
          %s525 = scalar_lea.sflag [#allocation4], %s524
          %s526 = sand.u32 %s46, 1
          %s527 = smul.addr %s526, 32
          %s528 = scalar_lea.vmem [#allocation3], %s527
          %s530 = ssub.s32 512, 512
          %531 = vsyncadd %s525, %s530
          %s532 = smul.addr %s36, 8
          %s533 = smul.addr %s532, 64
          %s534 = scalar_lea.hbm %s0, %s533
          %s535 = sshll.u32 %s528, 4
          %s536 = int_to_ptr.vmem [resolvable:$true] %s535
          %541 = dma.hbm_to_vmem [thread:$0]  %s534, 512, %s536, %s525, 64, 64, 4
        $region68: #{factorvae_forward_batched.1} parent=63 // pred_fallthru
          _
        // Predicated region
        $region69: #{factorvae_forward_batched.1} parent=63 // pred_check
          %p542 = pneg %p82
        $region70: #{factorvae_forward_batched.1} parent=63 // pred_check_branch
          %544 = sbr.rel (%p542) target = $region72
        $region71: #{factorvae_forward_batched.1} parent=63 // pred_region
          %s545 = sand.u32 %s36, 1
          %s546 = scalar_lea.sflag [#allocation7], %s545
          %s547 = sand.u32 %s72, 1
          %s548 = scalar_lea.vmem [#allocation6], %s547
          %s550 = ssub.s32 16, 16
          %551 = vsyncadd %s546, %s550
          %s552 = smul.addr %s36, 16
          %s553 = scalar_lea.hbm %s1, %s552
          %s555 = sshll.u32 %s548, 4
          %s556 = int_to_ptr.vmem [resolvable:$true] %s555
          %558 = dma.hbm_to_vmem [thread:$0]  %s553, 16, %s556, %s546
        $region72: #{factorvae_forward_batched.1} parent=63 // pred_fallthru
          _
      $region64: #{factorvae_forward_batched.1} parent=5 // pred_fallthru
        _
      %p559 = scmp.le.s32.totalorder 1, %s36
      %p560 = scmp.lt.s32.totalorder %s36, 5
      %p561 = pnand %p559, %p560
      %p562 = pneg %p561
      // Predicated region
      $region73: #{factorvae_forward_batched.1} parent=5 // pred_check
        _
      $region74: #{factorvae_forward_batched.1} parent=5 // pred_check_branch
        %564 = sbr.rel (%p561) target = $region76
      $region75: #{factorvae_forward_batched.1} parent=5 // pred_region
        %s565 = ssub.s32 %s36, 1
        %s566 = sand.u32 %s49, 1
        %s567 = scalar_lea.sflag [#allocation4], %s566
        %s568 = sand.u32 %s49, 1
        %s569 = smul.addr %s568, 32
        %s570 = scalar_lea.vmem [#allocation3], %s569
        // Predicated region
        $region77: #{factorvae_forward_batched.1} parent=75 // pred_check
          %p571 = pneg %p62
        $region78: #{factorvae_forward_batched.1} parent=75 // pred_check_branch
          %573 = sbr.rel (%p571) target = $region80
        $region79: #{factorvae_forward_batched.1} parent=75 // pred_region
          %574 = dma.done %s567, 512
        $region80: #{factorvae_forward_batched.1} parent=75 // pred_fallthru
          _
        %s575 = sand.u32 %s41, 1
        %s576 = scalar_lea.sflag [#allocation7], %s575
        %s577 = sand.u32 %s75, 1
        %s578 = scalar_lea.vmem [#allocation6], %s577
        // Predicated region
        $region81: #{factorvae_forward_batched.1} parent=75 // pred_check
          %p579 = pneg %p88
        $region82: #{factorvae_forward_batched.1} parent=75 // pred_check_branch
          %581 = sbr.rel (%p579) target = $region84
        $region83: #{factorvae_forward_batched.1} parent=75 // pred_region
          %582 = dma.done %s576, 16
        $region84: #{factorvae_forward_batched.1} parent=75 // pred_fallthru
          _
        // Predicated region
        $region85: #{factorvae_forward_batched.1} parent=75 // pred_check
          %p583 = pneg %p109
        $region86: #{factorvae_forward_batched.1} parent=75 // pred_check_branch
          %585 = sbr.rel (%p583) target = $region88
        $region87: #{factorvae_forward_batched.1} parent=75 // pred_region
          %586 = dma.done [#allocation7], 256
        $region88: #{factorvae_forward_batched.1} parent=75 // pred_fallthru
          _
        // Predicated region
        $region89: #{factorvae_forward_batched.1} parent=75 // pred_check
          %p587 = pneg %p130
        $region90: #{factorvae_forward_batched.1} parent=75 // pred_check_branch
          %589 = sbr.rel (%p587) target = $region92
        $region91: #{factorvae_forward_batched.1} parent=75 // pred_region
          %590 = dma.done [#allocation10], 16
        $region92: #{factorvae_forward_batched.1} parent=75 // pred_fallthru
          _
        // Predicated region
        $region93: #{factorvae_forward_batched.1} parent=75 // pred_check
          %p591 = pneg %p151
        $region94: #{factorvae_forward_batched.1} parent=75 // pred_check_branch
          %593 = sbr.rel (%p591) target = $region96
        $region95: #{factorvae_forward_batched.1} parent=75 // pred_region
          %594 = dma.done [#allocation10], 512
        $region96: #{factorvae_forward_batched.1} parent=75 // pred_fallthru
          _
        // Predicated region
        $region97: #{factorvae_forward_batched.1} parent=75 // pred_check
          %p595 = pneg %p172
        $region98: #{factorvae_forward_batched.1} parent=75 // pred_check_branch
          %597 = sbr.rel (%p595) target = $region100
        $region99: #{factorvae_forward_batched.1} parent=75 // pred_region
          %598 = dma.done [#allocation13], 16
        $region100: #{factorvae_forward_batched.1} parent=75 // pred_fallthru
          _
        // Predicated region
        $region101: #{factorvae_forward_batched.1} parent=75 // pred_check
          %p599 = pneg %p193
        $region102: #{factorvae_forward_batched.1} parent=75 // pred_check_branch
          %601 = sbr.rel (%p599) target = $region104
        $region103: #{factorvae_forward_batched.1} parent=75 // pred_region
          %602 = dma.done [#allocation13], 512
        $region104: #{factorvae_forward_batched.1} parent=75 // pred_fallthru
          _
        // Predicated region
        $region105: #{factorvae_forward_batched.1} parent=75 // pred_check
          %p603 = pneg %p214
        $region106: #{factorvae_forward_batched.1} parent=75 // pred_check_branch
          %605 = sbr.rel (%p603) target = $region108
        $region107: #{factorvae_forward_batched.1} parent=75 // pred_region
          %606 = dma.done [#allocation16], 16
        $region108: #{factorvae_forward_batched.1} parent=75 // pred_fallthru
          _
        // Predicated region
        $region109: #{factorvae_forward_batched.1} parent=75 // pred_check
          %p607 = pneg %p235
        $region110: #{factorvae_forward_batched.1} parent=75 // pred_check_branch
          %609 = sbr.rel (%p607) target = $region112
        $region111: #{factorvae_forward_batched.1} parent=75 // pred_region
          %610 = dma.done [#allocation16], 256
        $region112: #{factorvae_forward_batched.1} parent=75 // pred_fallthru
          _
        // Predicated region
        $region113: #{factorvae_forward_batched.1} parent=75 // pred_check
          %p611 = pneg %p256
        $region114: #{factorvae_forward_batched.1} parent=75 // pred_check_branch
          %613 = sbr.rel (%p611) target = $region116
        $region115: #{factorvae_forward_batched.1} parent=75 // pred_region
          %614 = dma.done [#allocation19], 16
        $region116: #{factorvae_forward_batched.1} parent=75 // pred_fallthru
          _
        // Predicated region
        $region117: #{factorvae_forward_batched.1} parent=75 // pred_check
          %p615 = pneg %p277
        $region118: #{factorvae_forward_batched.1} parent=75 // pred_check_branch
          %617 = sbr.rel (%p615) target = $region120
        $region119: #{factorvae_forward_batched.1} parent=75 // pred_region
          %618 = dma.done [#allocation19], 640
        $region120: #{factorvae_forward_batched.1} parent=75 // pred_fallthru
          _
        // Predicated region
        $region121: #{factorvae_forward_batched.1} parent=75 // pred_check
          %p619 = pneg %p298
        $region122: #{factorvae_forward_batched.1} parent=75 // pred_check_branch
          %621 = sbr.rel (%p619) target = $region124
        $region123: #{factorvae_forward_batched.1} parent=75 // pred_region
          %622 = dma.done [#allocation22], 640
        $region124: #{factorvae_forward_batched.1} parent=75 // pred_fallthru
          _
        // Predicated region
        $region125: #{factorvae_forward_batched.1} parent=75 // pred_check
          %p623 = pneg %p319
        $region126: #{factorvae_forward_batched.1} parent=75 // pred_check_branch
          %625 = sbr.rel (%p623) target = $region128
        $region127: #{factorvae_forward_batched.1} parent=75 // pred_region
          %626 = dma.done [#allocation22], 16
        $region128: #{factorvae_forward_batched.1} parent=75 // pred_fallthru
          _
        %s627 = sand.u32 %s49, 1
        %s628 = scalar_lea.sflag [#allocation4], %s627
        %s629 = sand.u32 %s49, 1
        %s630 = smul.addr %s629, 32
        %s631 = scalar_lea.vmem [#allocation3], %s630
        %p632 = pneg %p62
        %p633 = pneg %p59
        %s634 = sand.u32 %s41, 1
        %s635 = scalar_lea.sflag [#allocation7], %s634
        %s636 = sand.u32 %s75, 1
        %s637 = scalar_lea.vmem [#allocation6], %s636
        %p638 = pneg %p88
        %p639 = pneg %p85
        %p640 = pneg %p109
        %p641 = pneg %p106
        %p642 = pneg %p130
        %p643 = pneg %p127
        %p644 = pneg %p151
        %p645 = pneg %p148
        %p646 = pneg %p172
        %p647 = pneg %p169
        %p648 = pneg %p193
        %p649 = pneg %p190
        %p650 = pneg %p214
        %p651 = pneg %p211
        %p652 = pneg %p235
        %p653 = pneg %p232
        %p654 = pneg %p256
        %p655 = pneg %p253
        %p656 = pneg %p277
        %p657 = pneg %p274
        %p658 = pneg %p298
        %p659 = pneg %p295
        %p660 = pneg %p319
        %p661 = pneg %p316
        %p662 = pneg %p340
        %p663 = pneg %p337
        %p664 = pneg %p366
        %p665 = pneg %p363
        %s666 = sand.u32 %s353, 1
        %s667 = scalar_lea.sflag [#allocation5], %s666
        %s668 = sand.u32 %s353, 1
        %s669 = scalar_lea.vmem [#allocation24], %s668
        %v671 = vld [vmem:[%s570] sm:$0xf]
        %v672 = vld [vmem:[%s570 + $0x4] sm:$0xf]
        %v673 = vld [vmem:[%s570 + $0x8] sm:$0xf]
        %v674 = vld [vmem:[%s570 + $0xc] sm:$0xf]
        %v675 = vld [vmem:[%s570 + $0x10] sm:$0xf]
        %v676 = vld [vmem:[%s570 + $0x14] sm:$0xf]
        %v677 = vld [vmem:[%s570 + $0x18] sm:$0xf]
        %v678 = vld [vmem:[%s570 + $0x1c] sm:$0xf]
        %v679 = vld [vmem:[#allocation8] sm:$0xff]
        %v680 = vld [vmem:[#allocation8 + $0x8] sm:$0xff]
        %v681 = vpack.c.bf16 %v680, %v679
        %v682 = vld [vmem:[#allocation9] sm:$0x1]
        %v684 = vlaneseq
        %v685 = vshrl.u32 %v684, 7
        %v686 = vsub.s32 0, %v685
        %v687 = vrot.slane %v682, %v686
        %v697 = vunpack.c.l.b16 %v671
        %v698 = vunpack.c.l.b16 %v672
        %v699 = vunpack.c.l.b16 %v673
        %v700 = vunpack.c.l.b16 %v674
        %v701 = vunpack.c.l.b16 %v675
        %v702 = vunpack.c.l.b16 %v676
        %v703 = vunpack.c.l.b16 %v677
        %v704 = vunpack.c.l.b16 %v678
        %v705 = vpack.c.b16 %v698, %v697
        %v706 = vpack.c.b16 %v700, %v699
        %v707 = vpack.c.b16 %v702, %v701
        %v708 = vpack.c.b16 %v704, %v703
        %vm709 = vcmask 130048
        %v711 = vsel %vm709, %v705, 0
        %v714 = vsel %vm709, %v706, 0
        %v717 = vsel %vm709, %v707, 0
        %v720 = vsel %vm709, %v708, 0
        %722 = vmatprep.subr.bf16.mxu0 0
        %723 = vmatpush1.bf16.msra.mxu0 %v681
        %724 = vmatprep.subr.bf16.mxu0 0
        %725 = vmatpush1.bf16.msra.mxu0 0
        %726 = vmatprep.subr.bf16.mxu0 0
        %727 = vmatpush1.bf16.msra.mxu0 0
        %728 = vmatprep.subr.bf16.mxu0 0
        %729 = vmatpush1.bf16.msra.mxu0 0
        %730 = vmatprep.subr.bf16.mxu0 0
        %731 = vmatpush1.bf16.msra.mxu0 0
        %732 = vmatprep.subr.bf16.mxu0 0
        %733 = vmatpush1.bf16.msra.mxu0 0
        %734 = vmatprep.subr.bf16.mxu0 0
        %735 = vmatpush1.bf16.msra.mxu0 0
        %736 = vmatprep.subr.bf16.mxu0 0
        %737 = vmatpush1.bf16.msra.mxu0 0
        %738 = vmatprep.subr.bf16.mxu0 0
        %739 = vmatpush1.bf16.msra.mxu0 0
        %740 = vmatprep.subr.bf16.mxu0 0
        %741 = vmatpush1.bf16.msra.mxu0 0
        %742 = vmatprep.subr.bf16.mxu0 0
        %743 = vmatpush1.bf16.msra.mxu0 0
        %744 = vmatprep.subr.bf16.mxu0 0
        %745 = vmatpush1.bf16.msra.mxu0 0
        %746 = vmatprep.subr.bf16.mxu0 0
        %747 = vmatpush1.bf16.msra.mxu0 0
        %748 = vmatprep.subr.bf16.mxu0 0
        %749 = vmatpush1.bf16.msra.mxu0 0
        %750 = vmatprep.subr.bf16.mxu0 0
        %751 = vmatpush1.bf16.msra.mxu0 0
        %752 = vmatprep.subr.bf16.mxu0 0
        %753 = vmatpush1.bf16.msra.mxu0 0
        %754 = vmatprep.mubr.bf16.mxu0 0
        %755 = vmatmul.mubr.bf16.gmra.mrb[0].mxu0 %v711
        %v756 = vpop.f32.mrb[0].mxu0
        %v757 = vadd.f32 %v687, %v756
        %v758 = vpop.f32.mrb[0].mxu0
        %v759 = vpop.f32.mrb[0].mxu0
        %v760 = vadd.f32 %v687, %v759
        %v761 = vpop.f32.mrb[0].mxu0
        %762 = vmatprep.mubr.bf16.mxu0 0
        %763 = vmatmul.mubr.bf16.gmra.mrb[0].mxu0 %v714
        %v764 = vpop.f32.mrb[0].mxu0
        %v765 = vadd.f32 %v687, %v764
        %v766 = vpop.f32.mrb[0].mxu0
        %v767 = vpop.f32.mrb[0].mxu0
        %v768 = vadd.f32 %v687, %v767
        %v769 = vpop.f32.mrb[0].mxu0
        %770 = vmatprep.mubr.bf16.mxu0 0
        %771 = vmatmul.mubr.bf16.gmra.mrb[0].mxu0 %v717
        %v772 = vpop.f32.mrb[0].mxu0
        %v773 = vadd.f32 %v687, %v772
        %v774 = vpop.f32.mrb[0].mxu0
        %v775 = vpop.f32.mrb[0].mxu0
        %v776 = vadd.f32 %v687, %v775
        %v777 = vpop.f32.mrb[0].mxu0
        %778 = vmatprep.mubr.bf16.mxu0 0
        %779 = vmatmul.mubr.bf16.gmra.mrb[0].mxu0 %v720
        %v780 = vpop.f32.mrb[0].mxu0
        %v781 = vadd.f32 %v687, %v780
        %v782 = vpop.f32.mrb[0].mxu0
        %v783 = vpop.f32.mrb[0].mxu0
        %v784 = vadd.f32 %v687, %v783
        %v785 = vpop.f32.mrb[0].mxu0
        %786 = vdwg.mxu0
        %v787 = vld [vmem:[#allocation11] sm:$0xff]
        %v788 = vld [vmem:[#allocation11 + $0x8] sm:$0xff]
        %v789 = vld [vmem:[#allocation11 + $0x10] sm:$0xff]
        %v790 = vld [vmem:[#allocation11 + $0x18] sm:$0xff]
        %v791 = vpack.c.bf16 %v788, %v787
        %v792 = vpack.c.bf16 %v790, %v789
        %v793 = vld [vmem:[#allocation12] sm:$0x1]
        %v795 = vlaneseq
        %v796 = vshrl.u32 %v795, 7
        %v797 = vsub.s32 0, %v796
        %v798 = vrot.slane %v793, %v797
        %vm800 = vcmask 261120
        %v802 = vsel %vm800, 0, 0
        %804 = vmatprep.subr.bf16.mxu0 0
        %805 = vmatpush1.bf16.msra.mxu0 %v791
        %806 = vmatprep.subr.bf16.mxu0 0
        %807 = vmatpush1.bf16.msra.mxu0 %v792
        %808 = vmatprep.subr.bf16.mxu0 0
        %809 = vmatpush1.bf16.msra.mxu0 0
        %810 = vmatprep.subr.bf16.mxu0 0
        %811 = vmatpush1.bf16.msra.mxu0 0
        %812 = vmatprep.subr.bf16.mxu0 0
        %813 = vmatpush1.bf16.msra.mxu0 0
        %814 = vmatprep.subr.bf16.mxu0 0
        %815 = vmatpush1.bf16.msra.mxu0 0
        %816 = vmatprep.subr.bf16.mxu0 0
        %817 = vmatpush1.bf16.msra.mxu0 0
        %818 = vmatprep.subr.bf16.mxu0 0
        %819 = vmatpush1.bf16.msra.mxu0 0
        %820 = vmatprep.subr.bf16.mxu0 0
        %821 = vmatpush1.bf16.msra.mxu0 0
        %822 = vmatprep.subr.bf16.mxu0 0
        %823 = vmatpush1.bf16.msra.mxu0 0
        %824 = vmatprep.subr.bf16.mxu0 0
        %825 = vmatpush1.bf16.msra.mxu0 0
        %826 = vmatprep.subr.bf16.mxu0 0
        %827 = vmatpush1.bf16.msra.mxu0 0
        %828 = vmatprep.subr.bf16.mxu0 0
        %829 = vmatpush1.bf16.msra.mxu0 0
        %830 = vmatprep.subr.bf16.mxu0 0
        %831 = vmatpush1.bf16.msra.mxu0 0
        %832 = vmatprep.subr.bf16.mxu0 0
        %833 = vmatpush1.bf16.msra.mxu0 0
        %834 = vmatprep.subr.bf16.mxu0 0
        %835 = vmatpush1.bf16.msra.mxu0 0
        %836 = vmatprep.mubr.bf16.mxu0 0
        %837 = vmatmul.mubr.bf16.gmra.mrb[0].mxu0 %v802
        %v838 = vpop.f32.mrb[0].mxu0
        %v839 = vadd.f32 %v798, %v838
        %v840 = vpop.f32.mrb[0].mxu0
        %v841 = vpop.f32.mrb[0].mxu0
        %v842 = vpop.f32.mrb[0].mxu0
        %843 = vdwg.mxu0
        %v844 = vadd.f32 %v757, %v839
        %v845 = vmul.f32 %v844, 0.5
        %v846 = vtanh.pop %v845
        %v847 = vadd.f32 %v846, 1.0
        %v848 = vmul.f32 %v847, 0.5
        %850 = vrot.lane.b32.xlu0 %v839, 64
        %v851 = vpop.permute.xlu0 %850
        %v853 = vmul.f32 %v848, %v851
        %855 = vrot.lane.b32.xlu0 %v853, 64
        %v856 = vpop.permute.xlu0 %855
        %v858 = vadd.f32 %v757, %v856
        %v859 = vtanh.pop %v858
        %v860 = vsub.f32 1.0, %v848
        %862 = vrot.lane.b32.xlu0 %v859, 96
        %v863 = vpop.permute.xlu0 %862
        %v865 = vmul.f32 %v860, %v863
        %v866 = vmul.f32 %v848, 0.0
        %v867 = vadd.f32 %v865, %v866
        %v868 = vpack.c.bf16 %v867, %v867
        %870 = vrot.lane.b32.xlu0 %v868, 96
        %v871 = vpop.permute.xlu0 %870
        %v873 = vsel %vm800, %v871, 0
        %875 = vmatprep.subr.bf16.mxu0 0
        %876 = vmatpush1.bf16.msra.mxu0 %v791
        %877 = vmatprep.subr.bf16.mxu0 0
        %878 = vmatpush1.bf16.msra.mxu0 %v792
        %879 = vmatprep.subr.bf16.mxu0 0
        %880 = vmatpush1.bf16.msra.mxu0 0
        %881 = vmatprep.subr.bf16.mxu0 0
        %882 = vmatpush1.bf16.msra.mxu0 0
        %883 = vmatprep.subr.bf16.mxu0 0
        %884 = vmatpush1.bf16.msra.mxu0 0
        %885 = vmatprep.subr.bf16.mxu0 0
        %886 = vmatpush1.bf16.msra.mxu0 0
        %887 = vmatprep.subr.bf16.mxu0 0
        %888 = vmatpush1.bf16.msra.mxu0 0
        %889 = vmatprep.subr.bf16.mxu0 0
        %890 = vmatpush1.bf16.msra.mxu0 0
        %891 = vmatprep.subr.bf16.mxu0 0
        %892 = vmatpush1.bf16.msra.mxu0 0
        %893 = vmatprep.subr.bf16.mxu0 0
        %894 = vmatpush1.bf16.msra.mxu0 0
        %895 = vmatprep.subr.bf16.mxu0 0
        %896 = vmatpush1.bf16.msra.mxu0 0
        %897 = vmatprep.subr.bf16.mxu0 0
        %898 = vmatpush1.bf16.msra.mxu0 0
        %899 = vmatprep.subr.bf16.mxu0 0
        %900 = vmatpush1.bf16.msra.mxu0 0
        %901 = vmatprep.subr.bf16.mxu0 0
        %902 = vmatpush1.bf16.msra.mxu0 0
        %903 = vmatprep.subr.bf16.mxu0 0
        %904 = vmatpush1.bf16.msra.mxu0 0
        %905 = vmatprep.subr.bf16.mxu0 0
        %906 = vmatpush1.bf16.msra.mxu0 0
        %907 = vmatprep.mubr.bf16.mxu0 0
        %908 = vmatmul.mubr.bf16.gmra.mrb[0].mxu0 %v873
        %v909 = vpop.f32.mrb[0].mxu0
        %v910 = vadd.f32 %v798, %v909
        %v911 = vpop.f32.mrb[0].mxu0
        %v912 = vpop.f32.mrb[0].mxu0
        %v913 = vpop.f32.mrb[0].mxu0
        %914 = vdwg.mxu0
        %v915 = vadd.f32 %v760, %v910
        %v916 = vmul.f32 %v915, 0.5
        %v917 = vtanh.pop %v916
        %v918 = vadd.f32 %v917, 1.0
        %v919 = vmul.f32 %v918, 0.5
        %921 = vrot.lane.b32.xlu0 %v910, 64
        %v922 = vpop.permute.xlu0 %921
        %v924 = vmul.f32 %v919, %v922
        %926 = vrot.lane.b32.xlu0 %v924, 64
        %v927 = vpop.permute.xlu0 %926
        %v929 = vadd.f32 %v760, %v927
        %v930 = vtanh.pop %v929
        %v931 = vsub.f32 1.0, %v919
        %933 = vrot.lane.b32.xlu0 %v930, 96
        %v934 = vpop.permute.xlu0 %933
        %v936 = vmul.f32 %v931, %v934
        %v937 = vmul.f32 %v919, %v867
        %v938 = vadd.f32 %v936, %v937
        %v939 = vpack.c.bf16 %v938, %v938
        %941 = vrot.lane.b32.xlu0 %v939, 96
        %v942 = vpop.permute.xlu0 %941
        %v944 = vsel %vm800, %v942, 0
        %946 = vmatprep.subr.bf16.mxu0 0
        %947 = vmatpush1.bf16.msra.mxu0 %v791
        %948 = vmatprep.subr.bf16.mxu0 0
        %949 = vmatpush1.bf16.msra.mxu0 %v792
        %950 = vmatprep.subr.bf16.mxu0 0
        %951 = vmatpush1.bf16.msra.mxu0 0
        %952 = vmatprep.subr.bf16.mxu0 0
        %953 = vmatpush1.bf16.msra.mxu0 0
        %954 = vmatprep.subr.bf16.mxu0 0
        %955 = vmatpush1.bf16.msra.mxu0 0
        %956 = vmatprep.subr.bf16.mxu0 0
        %957 = vmatpush1.bf16.msra.mxu0 0
        %958 = vmatprep.subr.bf16.mxu0 0
        %959 = vmatpush1.bf16.msra.mxu0 0
        %960 = vmatprep.subr.bf16.mxu0 0
        %961 = vmatpush1.bf16.msra.mxu0 0
        %962 = vmatprep.subr.bf16.mxu0 0
        %963 = vmatpush1.bf16.msra.mxu0 0
        %964 = vmatprep.subr.bf16.mxu0 0
        %965 = vmatpush1.bf16.msra.mxu0 0
        %966 = vmatprep.subr.bf16.mxu0 0
        %967 = vmatpush1.bf16.msra.mxu0 0
        %968 = vmatprep.subr.bf16.mxu0 0
        %969 = vmatpush1.bf16.msra.mxu0 0
        %970 = vmatprep.subr.bf16.mxu0 0
        %971 = vmatpush1.bf16.msra.mxu0 0
        %972 = vmatprep.subr.bf16.mxu0 0
        %973 = vmatpush1.bf16.msra.mxu0 0
        %974 = vmatprep.subr.bf16.mxu0 0
        %975 = vmatpush1.bf16.msra.mxu0 0
        %976 = vmatprep.subr.bf16.mxu0 0
        %977 = vmatpush1.bf16.msra.mxu0 0
        %978 = vmatprep.mubr.bf16.mxu0 0
        %979 = vmatmul.mubr.bf16.gmra.mrb[0].mxu0 %v944
        %v980 = vpop.f32.mrb[0].mxu0
        %v981 = vadd.f32 %v798, %v980
        %v982 = vpop.f32.mrb[0].mxu0
        %v983 = vpop.f32.mrb[0].mxu0
        %v984 = vpop.f32.mrb[0].mxu0
        %985 = vdwg.mxu0
        %v986 = vadd.f32 %v765, %v981
        %v987 = vmul.f32 %v986, 0.5
        %v988 = vtanh.pop %v987
        %v989 = vadd.f32 %v988, 1.0
        %v990 = vmul.f32 %v989, 0.5
        %992 = vrot.lane.b32.xlu0 %v981, 64
        %v993 = vpop.permute.xlu0 %992
        %v995 = vmul.f32 %v990, %v993
        %997 = vrot.lane.b32.xlu0 %v995, 64
        %v998 = vpop.permute.xlu0 %997
        %v1000 = vadd.f32 %v765, %v998
        %v1001 = vtanh.pop %v1000
        %v1002 = vsub.f32 1.0, %v990
        %1004 = vrot.lane.b32.xlu0 %v1001, 96
        %v1005 = vpop.permute.xlu0 %1004
        %v1007 = vmul.f32 %v1002, %v1005
        %v1008 = vmul.f32 %v990, %v938
        %v1009 = vadd.f32 %v1007, %v1008
        %v1010 = vpack.c.bf16 %v1009, %v1009
        %1012 = vrot.lane.b32.xlu0 %v1010, 96
        %v1013 = vpop.permute.xlu0 %1012
        %v1015 = vsel %vm800, %v1013, 0
        %1017 = vmatprep.subr.bf16.mxu0 0
        %1018 = vmatpush1.bf16.msra.mxu0 %v791
        %1019 = vmatprep.subr.bf16.mxu0 0
        %1020 = vmatpush1.bf16.msra.mxu0 %v792
        %1021 = vmatprep.subr.bf16.mxu0 0
        %1022 = vmatpush1.bf16.msra.mxu0 0
        %1023 = vmatprep.subr.bf16.mxu0 0
        %1024 = vmatpush1.bf16.msra.mxu0 0
        %1025 = vmatprep.subr.bf16.mxu0 0
        %1026 = vmatpush1.bf16.msra.mxu0 0
        %1027 = vmatprep.subr.bf16.mxu0 0
        %1028 = vmatpush1.bf16.msra.mxu0 0
        %1029 = vmatprep.subr.bf16.mxu0 0
        %1030 = vmatpush1.bf16.msra.mxu0 0
        %1031 = vmatprep.subr.bf16.mxu0 0
        %1032 = vmatpush1.bf16.msra.mxu0 0
        %1033 = vmatprep.subr.bf16.mxu0 0
        %1034 = vmatpush1.bf16.msra.mxu0 0
        %1035 = vmatprep.subr.bf16.mxu0 0
        %1036 = vmatpush1.bf16.msra.mxu0 0
        %1037 = vmatprep.subr.bf16.mxu0 0
        %1038 = vmatpush1.bf16.msra.mxu0 0
        %1039 = vmatprep.subr.bf16.mxu0 0
        %1040 = vmatpush1.bf16.msra.mxu0 0
        %1041 = vmatprep.subr.bf16.mxu0 0
        %1042 = vmatpush1.bf16.msra.mxu0 0
        %1043 = vmatprep.subr.bf16.mxu0 0
        %1044 = vmatpush1.bf16.msra.mxu0 0
        %1045 = vmatprep.subr.bf16.mxu0 0
        %1046 = vmatpush1.bf16.msra.mxu0 0
        %1047 = vmatprep.subr.bf16.mxu0 0
        %1048 = vmatpush1.bf16.msra.mxu0 0
        %1049 = vmatprep.mubr.bf16.mxu0 0
        %1050 = vmatmul.mubr.bf16.gmra.mrb[0].mxu0 %v1015
        %v1051 = vpop.f32.mrb[0].mxu0
        %v1052 = vadd.f32 %v798, %v1051
        %v1053 = vpop.f32.mrb[0].mxu0
        %v1054 = vpop.f32.mrb[0].mxu0
        %v1055 = vpop.f32.mrb[0].mxu0
        %1056 = vdwg.mxu0
        %v1057 = vadd.f32 %v768, %v1052
        %v1058 = vmul.f32 %v1057, 0.5
        %v1059 = vtanh.pop %v1058
        %v1060 = vadd.f32 %v1059, 1.0
        %v1061 = vmul.f32 %v1060, 0.5
        %1063 = vrot.lane.b32.xlu0 %v1052, 64
        %v1064 = vpop.permute.xlu0 %1063
        %v1066 = vmul.f32 %v1061, %v1064
        %1068 = vrot.lane.b32.xlu0 %v1066, 64
        %v1069 = vpop.permute.xlu0 %1068
        %v1071 = vadd.f32 %v768, %v1069
        %v1072 = vtanh.pop %v1071
        %v1073 = vsub.f32 1.0, %v1061
        %1075 = vrot.lane.b32.xlu0 %v1072, 96
        %v1076 = vpop.permute.xlu0 %1075
        %v1078 = vmul.f32 %v1073, %v1076
        %v1079 = vmul.f32 %v1061, %v1009
        %v1080 = vadd.f32 %v1078, %v1079
        %v1081 = vpack.c.bf16 %v1080, %v1080
        %1083 = vrot.lane.b32.xlu0 %v1081, 96
        %v1084 = vpop.permute.xlu0 %1083
        %v1086 = vsel %vm800, %v1084, 0
        %1088 = vmatprep.subr.bf16.mxu0 0
        %1089 = vmatpush1.bf16.msra.mxu0 %v791
        %1090 = vmatprep.subr.bf16.mxu0 0
        %1091 = vmatpush1.bf16.msra.mxu0 %v792
        %1092 = vmatprep.subr.bf16.mxu0 0
        %1093 = vmatpush1.bf16.msra.mxu0 0
        %1094 = vmatprep.subr.bf16.mxu0 0
        %1095 = vmatpush1.bf16.msra.mxu0 0
        %1096 = vmatprep.subr.bf16.mxu0 0
        %1097 = vmatpush1.bf16.msra.mxu0 0
        %1098 = vmatprep.subr.bf16.mxu0 0
        %1099 = vmatpush1.bf16.msra.mxu0 0
        %1100 = vmatprep.subr.bf16.mxu0 0
        %1101 = vmatpush1.bf16.msra.mxu0 0
        %1102 = vmatprep.subr.bf16.mxu0 0
        %1103 = vmatpush1.bf16.msra.mxu0 0
        %1104 = vmatprep.subr.bf16.mxu0 0
        %1105 = vmatpush1.bf16.msra.mxu0 0
        %1106 = vmatprep.subr.bf16.mxu0 0
        %1107 = vmatpush1.bf16.msra.mxu0 0
        %1108 = vmatprep.subr.bf16.mxu0 0
        %1109 = vmatpush1.bf16.msra.mxu0 0
        %1110 = vmatprep.subr.bf16.mxu0 0
        %1111 = vmatpush1.bf16.msra.mxu0 0
        %1112 = vmatprep.subr.bf16.mxu0 0
        %1113 = vmatpush1.bf16.msra.mxu0 0
        %1114 = vmatprep.subr.bf16.mxu0 0
        %1115 = vmatpush1.bf16.msra.mxu0 0
        %1116 = vmatprep.subr.bf16.mxu0 0
        %1117 = vmatpush1.bf16.msra.mxu0 0
        %1118 = vmatprep.subr.bf16.mxu0 0
        %1119 = vmatpush1.bf16.msra.mxu0 0
        %1120 = vmatprep.mubr.bf16.mxu0 0
        %1121 = vmatmul.mubr.bf16.gmra.mrb[0].mxu0 %v1086
        %v1122 = vpop.f32.mrb[0].mxu0
        %v1123 = vadd.f32 %v798, %v1122
        %v1124 = vpop.f32.mrb[0].mxu0
        %v1125 = vpop.f32.mrb[0].mxu0
        %v1126 = vpop.f32.mrb[0].mxu0
        %1127 = vdwg.mxu0
        %v1128 = vadd.f32 %v773, %v1123
        %v1129 = vmul.f32 %v1128, 0.5
        %v1130 = vtanh.pop %v1129
        %v1131 = vadd.f32 %v1130, 1.0
        %v1132 = vmul.f32 %v1131, 0.5
        %1134 = vrot.lane.b32.xlu0 %v1123, 64
        %v1135 = vpop.permute.xlu0 %1134
        %v1137 = vmul.f32 %v1132, %v1135
        %1139 = vrot.lane.b32.xlu0 %v1137, 64
        %v1140 = vpop.permute.xlu0 %1139
        %v1142 = vadd.f32 %v773, %v1140
        %v1143 = vtanh.pop %v1142
        %v1144 = vsub.f32 1.0, %v1132
        %1146 = vrot.lane.b32.xlu0 %v1143, 96
        %v1147 = vpop.permute.xlu0 %1146
        %v1149 = vmul.f32 %v1144, %v1147
        %v1150 = vmul.f32 %v1132, %v1080
        %v1151 = vadd.f32 %v1149, %v1150
        %v1152 = vpack.c.bf16 %v1151, %v1151
        %1154 = vrot.lane.b32.xlu0 %v1152, 96
        %v1155 = vpop.permute.xlu0 %1154
        %v1157 = vsel %vm800, %v1155, 0
        %1159 = vmatprep.subr.bf16.mxu0 0
        %1160 = vmatpush1.bf16.msra.mxu0 %v791
        %1161 = vmatprep.subr.bf16.mxu0 0
        %1162 = vmatpush1.bf16.msra.mxu0 %v792
        %1163 = vmatprep.subr.bf16.mxu0 0
        %1164 = vmatpush1.bf16.msra.mxu0 0
        %1165 = vmatprep.subr.bf16.mxu0 0
        %1166 = vmatpush1.bf16.msra.mxu0 0
        %1167 = vmatprep.subr.bf16.mxu0 0
        %1168 = vmatpush1.bf16.msra.mxu0 0
        %1169 = vmatprep.subr.bf16.mxu0 0
        %1170 = vmatpush1.bf16.msra.mxu0 0
        %1171 = vmatprep.subr.bf16.mxu0 0
        %1172 = vmatpush1.bf16.msra.mxu0 0
        %1173 = vmatprep.subr.bf16.mxu0 0
        %1174 = vmatpush1.bf16.msra.mxu0 0
        %1175 = vmatprep.subr.bf16.mxu0 0
        %1176 = vmatpush1.bf16.msra.mxu0 0
        %1177 = vmatprep.subr.bf16.mxu0 0
        %1178 = vmatpush1.bf16.msra.mxu0 0
        %1179 = vmatprep.subr.bf16.mxu0 0
        %1180 = vmatpush1.bf16.msra.mxu0 0
        %1181 = vmatprep.subr.bf16.mxu0 0
        %1182 = vmatpush1.bf16.msra.mxu0 0
        %1183 = vmatprep.subr.bf16.mxu0 0
        %1184 = vmatpush1.bf16.msra.mxu0 0
        %1185 = vmatprep.subr.bf16.mxu0 0
        %1186 = vmatpush1.bf16.msra.mxu0 0
        %1187 = vmatprep.subr.bf16.mxu0 0
        %1188 = vmatpush1.bf16.msra.mxu0 0
        %1189 = vmatprep.subr.bf16.mxu0 0
        %1190 = vmatpush1.bf16.msra.mxu0 0
        %1191 = vmatprep.mubr.bf16.mxu0 0
        %1192 = vmatmul.mubr.bf16.gmra.mrb[0].mxu0 %v1157
        %v1193 = vpop.f32.mrb[0].mxu0
        %v1194 = vadd.f32 %v798, %v1193
        %v1195 = vpop.f32.mrb[0].mxu0
        %v1196 = vpop.f32.mrb[0].mxu0
        %v1197 = vpop.f32.mrb[0].mxu0
        %1198 = vdwg.mxu0
        %v1199 = vadd.f32 %v776, %v1194
        %v1200 = vmul.f32 %v1199, 0.5
        %v1201 = vtanh.pop %v1200
        %v1202 = vadd.f32 %v1201, 1.0
        %v1203 = vmul.f32 %v1202, 0.5
        %1205 = vrot.lane.b32.xlu0 %v1194, 64
        %v1206 = vpop.permute.xlu0 %1205
        %v1208 = vmul.f32 %v1203, %v1206
        %1210 = vrot.lane.b32.xlu0 %v1208, 64
        %v1211 = vpop.permute.xlu0 %1210
        %v1213 = vadd.f32 %v776, %v1211
        %v1214 = vtanh.pop %v1213
        %v1215 = vsub.f32 1.0, %v1203
        %1217 = vrot.lane.b32.xlu0 %v1214, 96
        %v1218 = vpop.permute.xlu0 %1217
        %v1220 = vmul.f32 %v1215, %v1218
        %v1221 = vmul.f32 %v1203, %v1151
        %v1222 = vadd.f32 %v1220, %v1221
        %v1223 = vpack.c.bf16 %v1222, %v1222
        %1225 = vrot.lane.b32.xlu0 %v1223, 96
        %v1226 = vpop.permute.xlu0 %1225
        %v1228 = vsel %vm800, %v1226, 0
        %1230 = vmatprep.subr.bf16.mxu0 0
        %1231 = vmatpush1.bf16.msra.mxu0 %v791
        %1232 = vmatprep.subr.bf16.mxu0 0
        %1233 = vmatpush1.bf16.msra.mxu0 %v792
        %1234 = vmatprep.subr.bf16.mxu0 0
        %1235 = vmatpush1.bf16.msra.mxu0 0
        %1236 = vmatprep.subr.bf16.mxu0 0
        %1237 = vmatpush1.bf16.msra.mxu0 0
        %1238 = vmatprep.subr.bf16.mxu0 0
        %1239 = vmatpush1.bf16.msra.mxu0 0
        %1240 = vmatprep.subr.bf16.mxu0 0
        %1241 = vmatpush1.bf16.msra.mxu0 0
        %1242 = vmatprep.subr.bf16.mxu0 0
        %1243 = vmatpush1.bf16.msra.mxu0 0
        %1244 = vmatprep.subr.bf16.mxu0 0
        %1245 = vmatpush1.bf16.msra.mxu0 0
        %1246 = vmatprep.subr.bf16.mxu0 0
        %1247 = vmatpush1.bf16.msra.mxu0 0
        %1248 = vmatprep.subr.bf16.mxu0 0
        %1249 = vmatpush1.bf16.msra.mxu0 0
        %1250 = vmatprep.subr.bf16.mxu0 0
        %1251 = vmatpush1.bf16.msra.mxu0 0
        %1252 = vmatprep.subr.bf16.mxu0 0
        %1253 = vmatpush1.bf16.msra.mxu0 0
        %1254 = vmatprep.subr.bf16.mxu0 0
        %1255 = vmatpush1.bf16.msra.mxu0 0
        %1256 = vmatprep.subr.bf16.mxu0 0
        %1257 = vmatpush1.bf16.msra.mxu0 0
        %1258 = vmatprep.subr.bf16.mxu0 0
        %1259 = vmatpush1.bf16.msra.mxu0 0
        %1260 = vmatprep.subr.bf16.mxu0 0
        %1261 = vmatpush1.bf16.msra.mxu0 0
        %1262 = vmatprep.mubr.bf16.mxu0 0
        %1263 = vmatmul.mubr.bf16.gmra.mrb[0].mxu0 %v1228
        %v1264 = vpop.f32.mrb[0].mxu0
        %v1265 = vadd.f32 %v798, %v1264
        %v1266 = vpop.f32.mrb[0].mxu0
        %v1267 = vpop.f32.mrb[0].mxu0
        %v1268 = vpop.f32.mrb[0].mxu0
        %1269 = vdwg.mxu0
        %v1270 = vadd.f32 %v781, %v1265
        %v1271 = vmul.f32 %v1270, 0.5
        %v1272 = vtanh.pop %v1271
        %v1273 = vadd.f32 %v1272, 1.0
        %v1274 = vmul.f32 %v1273, 0.5
        %1276 = vrot.lane.b32.xlu0 %v1265, 64
        %v1277 = vpop.permute.xlu0 %1276
        %v1279 = vmul.f32 %v1274, %v1277
        %1281 = vrot.lane.b32.xlu0 %v1279, 64
        %v1282 = vpop.permute.xlu0 %1281
        %v1284 = vadd.f32 %v781, %v1282
        %v1285 = vtanh.pop %v1284
        %v1286 = vsub.f32 1.0, %v1274
        %1288 = vrot.lane.b32.xlu0 %v1285, 96
        %v1289 = vpop.permute.xlu0 %1288
        %v1291 = vmul.f32 %v1286, %v1289
        %v1292 = vmul.f32 %v1274, %v1222
        %v1293 = vadd.f32 %v1291, %v1292
        %v1294 = vpack.c.bf16 %v1293, %v1293
        %1296 = vrot.lane.b32.xlu0 %v1294, 96
        %v1297 = vpop.permute.xlu0 %1296
        %v1299 = vsel %vm800, %v1297, 0
        %1301 = vmatprep.subr.bf16.mxu0 0
        %1302 = vmatpush1.bf16.msra.mxu0 %v791
        %1303 = vmatprep.subr.bf16.mxu0 0
        %1304 = vmatpush1.bf16.msra.mxu0 %v792
        %1305 = vmatprep.subr.bf16.mxu0 0
        %1306 = vmatpush1.bf16.msra.mxu0 0
        %1307 = vmatprep.subr.bf16.mxu0 0
        %1308 = vmatpush1.bf16.msra.mxu0 0
        %1309 = vmatprep.subr.bf16.mxu0 0
        %1310 = vmatpush1.bf16.msra.mxu0 0
        %1311 = vmatprep.subr.bf16.mxu0 0
        %1312 = vmatpush1.bf16.msra.mxu0 0
        %1313 = vmatprep.subr.bf16.mxu0 0
        %1314 = vmatpush1.bf16.msra.mxu0 0
        %1315 = vmatprep.subr.bf16.mxu0 0
        %1316 = vmatpush1.bf16.msra.mxu0 0
        %1317 = vmatprep.subr.bf16.mxu0 0
        %1318 = vmatpush1.bf16.msra.mxu0 0
        %1319 = vmatprep.subr.bf16.mxu0 0
        %1320 = vmatpush1.bf16.msra.mxu0 0
        %1321 = vmatprep.subr.bf16.mxu0 0
        %1322 = vmatpush1.bf16.msra.mxu0 0
        %1323 = vmatprep.subr.bf16.mxu0 0
        %1324 = vmatpush1.bf16.msra.mxu0 0
        %1325 = vmatprep.subr.bf16.mxu0 0
        %1326 = vmatpush1.bf16.msra.mxu0 0
        %1327 = vmatprep.subr.bf16.mxu0 0
        %1328 = vmatpush1.bf16.msra.mxu0 0
        %1329 = vmatprep.subr.bf16.mxu0 0
        %1330 = vmatpush1.bf16.msra.mxu0 0
        %1331 = vmatprep.subr.bf16.mxu0 0
        %1332 = vmatpush1.bf16.msra.mxu0 0
        %1333 = vmatprep.mubr.bf16.mxu0 0
        %1334 = vmatmul.mubr.bf16.gmra.mrb[0].mxu0 %v1299
        %v1335 = vpop.f32.mrb[0].mxu0
        %v1336 = vadd.f32 %v798, %v1335
        %v1337 = vpop.f32.mrb[0].mxu0
        %v1338 = vpop.f32.mrb[0].mxu0
        %v1339 = vpop.f32.mrb[0].mxu0
        %1340 = vdwg.mxu0
        %v1341 = vadd.f32 %v784, %v1336
        %v1342 = vmul.f32 %v1341, 0.5
        %v1343 = vtanh.pop %v1342
        %v1344 = vadd.f32 %v1343, 1.0
        %v1345 = vmul.f32 %v1344, 0.5
        %1347 = vrot.lane.b32.xlu0 %v1336, 64
        %v1348 = vpop.permute.xlu0 %1347
        %v1350 = vmul.f32 %v1345, %v1348
        %1352 = vrot.lane.b32.xlu0 %v1350, 64
        %v1353 = vpop.permute.xlu0 %1352
        %v1355 = vadd.f32 %v784, %v1353
        %v1356 = vtanh.pop %v1355
        %v1357 = vsub.f32 1.0, %v1345
        %1359 = vrot.lane.b32.xlu0 %v1356, 96
        %v1360 = vpop.permute.xlu0 %1359
        %v1362 = vmul.f32 %v1357, %v1360
        %v1363 = vmul.f32 %v1345, %v1293
        %v1364 = vadd.f32 %v1362, %v1363
        %v1365 = vld [vmem:[#allocation14] sm:$0xff]
        %v1366 = vld [vmem:[#allocation14 + $0x8] sm:$0xff]
        %v1367 = vld [vmem:[#allocation14 + $0x10] sm:$0xff]
        %v1368 = vld [vmem:[#allocation14 + $0x18] sm:$0xff]
        %v1369 = vpack.c.bf16 %v1364, %v1364
        %v1370 = vpack.c.bf16 %v1366, %v1365
        %v1371 = vpack.c.bf16 %v1368, %v1367
        %v1372 = vld [vmem:[#allocation15] sm:$0x1]
        %v1374 = vlaneseq
        %v1375 = vshrl.u32 %v1374, 7
        %v1376 = vsub.s32 0, %v1375
        %v1377 = vrot.slane %v1372, %v1376
        %1380 = vrot.lane.b32.xlu0 %v1369, 96
        %v1381 = vpop.permute.xlu0 %1380
        %v1383 = vsel %vm800, %v1381, 0
        %1385 = vmatprep.subr.bf16.mxu0 0
        %1386 = vmatpush1.bf16.msra.mxu0 %v1370
        %1387 = vmatprep.subr.bf16.mxu0 0
        %1388 = vmatpush1.bf16.msra.mxu0 %v1371
        %1389 = vmatprep.subr.bf16.mxu0 0
        %1390 = vmatpush1.bf16.msra.mxu0 0
        %1391 = vmatprep.subr.bf16.mxu0 0
        %1392 = vmatpush1.bf16.msra.mxu0 0
        %1393 = vmatprep.subr.bf16.mxu0 0
        %1394 = vmatpush1.bf16.msra.mxu0 0
        %1395 = vmatprep.subr.bf16.mxu0 0
        %1396 = vmatpush1.bf16.msra.mxu0 0
        %1397 = vmatprep.subr.bf16.mxu0 0
        %1398 = vmatpush1.bf16.msra.mxu0 0
        %1399 = vmatprep.subr.bf16.mxu0 0
        %1400 = vmatpush1.bf16.msra.mxu0 0
        %1401 = vmatprep.subr.bf16.mxu0 0
        %1402 = vmatpush1.bf16.msra.mxu0 0
        %1403 = vmatprep.subr.bf16.mxu0 0
        %1404 = vmatpush1.bf16.msra.mxu0 0
        %1405 = vmatprep.subr.bf16.mxu0 0
        %1406 = vmatpush1.bf16.msra.mxu0 0
        %1407 = vmatprep.subr.bf16.mxu0 0
        %1408 = vmatpush1.bf16.msra.mxu0 0
        %1409 = vmatprep.subr.bf16.mxu0 0
        %1410 = vmatpush1.bf16.msra.mxu0 0
        %1411 = vmatprep.subr.bf16.mxu0 0
        %1412 = vmatpush1.bf16.msra.mxu0 0
        %1413 = vmatprep.subr.bf16.mxu0 0
        %1414 = vmatpush1.bf16.msra.mxu0 0
        %1415 = vmatprep.subr.bf16.mxu0 0
        %1416 = vmatpush1.bf16.msra.mxu0 0
        %1417 = vmatprep.mubr.bf16.mxu0 0
        %1418 = vmatmul.mubr.bf16.gmra.mrb[0].mxu0 %v1383
        %v1419 = vpop.f32.mrb[0].mxu0
        %v1420 = vadd.f32 %v1377, %v1419
        %v1421 = vpop.f32.mrb[0].mxu0
        %v1422 = vpop.f32.mrb[0].mxu0
        %v1423 = vpop.f32.mrb[0].mxu0
        %1424 = vdwg.mxu0
        %v1425 = vsel %vm709, %v1420, -inf
        %v1426 = vrot.slane %v1425, 4
        %v1427 = vmax.f32 %v1425, %v1426
        %v1428 = vrot.slane %v1427, 2
        %v1429 = vmax.f32 %v1427, %v1428
        %v1430 = vrot.slane %v1429, 1
        %v1431 = vmax.f32 %v1429, %v1430
        %v1432 = vsub.f32 %v1420, %v1431
        %v1433 = vmul.f32 %v1432, 1.442695
        %v1434 = vpow.pop %v1433
        %v1435 = vsel %vm709, %v1434, 0.0
        %v1436 = vrot.slane %v1435, 4
        %v1437 = vadd.f32 %v1435, %v1436
        %v1438 = vrot.slane %v1437, 2
        %v1439 = vadd.f32 %v1437, %v1438
        %v1440 = vrot.slane %v1439, 1
        %v1441 = vadd.f32 %v1439, %v1440
        %v1442 = vrcp.pop %v1441
        %v1443 = vmul.f32 %v1434, %v1442
        %v1444 = vld [vmem:[%s578] sm:$0x1]
        %v1445 = vpack.c.bf16 %v1444, %v1444
        %v1446 = vpack.c.bf16 %v1443, %v1443
        %vm1447 = vcmask 64512
        %v1449 = vsel %vm1447, %v1445, 0
        %vm1451 = vcmask 1043456
        %v1453 = vsel %vm1451, %v1446, 0
        %1455 = vmatprep.subr.bf16.mxu0 0
        %1456 = vmatpush1.bf16.msra.mxu0 %v1453
        %1457 = vmatprep.subr.bf16.mxu0 0
        %1458 = vmatpush1.bf16.msra.mxu0 0
        %1459 = vmatprep.subr.bf16.mxu0 0
        %1460 = vmatpush1.bf16.msra.mxu0 0
        %1461 = vmatprep.subr.bf16.mxu0 0
        %1462 = vmatpush1.bf16.msra.mxu0 0
        %1463 = vmatprep.subr.bf16.mxu0 0
        %1464 = vmatpush1.bf16.msra.mxu0 0
        %1465 = vmatprep.subr.bf16.mxu0 0
        %1466 = vmatpush1.bf16.msra.mxu0 0
        %1467 = vmatprep.subr.bf16.mxu0 0
        %1468 = vmatpush1.bf16.msra.mxu0 0
        %1469 = vmatprep.subr.bf16.mxu0 0
        %1470 = vmatpush1.bf16.msra.mxu0 0
        %1471 = vmatprep.subr.bf16.mxu0 0
        %1472 = vmatpush1.bf16.msra.mxu0 0
        %1473 = vmatprep.subr.bf16.mxu0 0
        %1474 = vmatpush1.bf16.msra.mxu0 0
        %1475 = vmatprep.subr.bf16.mxu0 0
        %1476 = vmatpush1.bf16.msra.mxu0 0
        %1477 = vmatprep.subr.bf16.mxu0 0
        %1478 = vmatpush1.bf16.msra.mxu0 0
        %1479 = vmatprep.subr.bf16.mxu0 0
        %1480 = vmatpush1.bf16.msra.mxu0 0
        %1481 = vmatprep.subr.bf16.mxu0 0
        %1482 = vmatpush1.bf16.msra.mxu0 0
        %1483 = vmatprep.subr.bf16.mxu0 0
        %1484 = vmatpush1.bf16.msra.mxu0 0
        %1485 = vmatprep.subr.bf16.mxu0 0
        %1486 = vmatpush1.bf16.msra.mxu0 0
        %1487 = vmatprep.mubr.bf16.mxu0 0
        %1488 = vmatmul.mubr.bf16.gmra.mrb[0].mxu0 %v1449
        %v1489 = vpop.f32.mrb[0].mxu0
        %v1490 = vadd.f32 0.0, %v1489
        %v1491 = vpop.f32.mrb[0].mxu0
        %v1492 = vpop.f32.mrb[0].mxu0
        %v1493 = vpop.f32.mrb[0].mxu0
        %1494 = vdwg.mxu0
        %v1495 = vld [vmem:[#allocation17] sm:$0xff]
        %v1496 = vld [vmem:[#allocation17 + $0x8] sm:$0xff]
        %v1497 = vpack.c.bf16 %v1490, %v1490
        %v1498 = vpack.c.bf16 %v1496, %v1495
        %v1499 = vld [vmem:[#allocation18] sm:$0x1]
        %v1501 = vsel %vm709, %v1497, 0
        %1503 = vmatprep.subr.bf16.mxu0 0
        %1504 = vmatpush1.bf16.msra.mxu0 %v1498
        %1505 = vmatprep.subr.bf16.mxu0 0
        %1506 = vmatpush1.bf16.msra.mxu0 0
        %1507 = vmatprep.subr.bf16.mxu0 0
        %1508 = vmatpush1.bf16.msra.mxu0 0
        %1509 = vmatprep.subr.bf16.mxu0 0
        %1510 = vmatpush1.bf16.msra.mxu0 0
        %1511 = vmatprep.subr.bf16.mxu0 0
        %1512 = vmatpush1.bf16.msra.mxu0 0
        %1513 = vmatprep.subr.bf16.mxu0 0
        %1514 = vmatpush1.bf16.msra.mxu0 0
        %1515 = vmatprep.subr.bf16.mxu0 0
        %1516 = vmatpush1.bf16.msra.mxu0 0
        %1517 = vmatprep.subr.bf16.mxu0 0
        %1518 = vmatpush1.bf16.msra.mxu0 0
        %1519 = vmatprep.subr.bf16.mxu0 0
        %1520 = vmatpush1.bf16.msra.mxu0 0
        %1521 = vmatprep.subr.bf16.mxu0 0
        %1522 = vmatpush1.bf16.msra.mxu0 0
        %1523 = vmatprep.subr.bf16.mxu0 0
        %1524 = vmatpush1.bf16.msra.mxu0 0
        %1525 = vmatprep.subr.bf16.mxu0 0
        %1526 = vmatpush1.bf16.msra.mxu0 0
        %1527 = vmatprep.subr.bf16.mxu0 0
        %1528 = vmatpush1.bf16.msra.mxu0 0
        %1529 = vmatprep.subr.bf16.mxu0 0
        %1530 = vmatpush1.bf16.msra.mxu0 0
        %1531 = vmatprep.subr.bf16.mxu0 0
        %1532 = vmatpush1.bf16.msra.mxu0 0
        %1533 = vmatprep.subr.bf16.mxu0 0
        %1534 = vmatpush1.bf16.msra.mxu0 0
        %1535 = vmatprep.mubr.bf16.mxu0 0
        %1536 = vmatmul.mubr.bf16.gmra.mrb[0].mxu0 %v1501
        %v1537 = vpop.f32.mrb[0].mxu0
        %v1538 = vadd.f32 %v1499, %v1537
        %v1539 = vpop.f32.mrb[0].mxu0
        %v1540 = vpop.f32.mrb[0].mxu0
        %v1541 = vpop.f32.mrb[0].mxu0
        %1542 = vdwg.mxu0
        %1544 = vrot.lane.b32.xlu0 %v1364, 96
        %v1545 = vpop.permute.xlu0 %1544
        %1547 = vxpose.xlu0.b32.start [1/16] %v1545, 128
        %1548 = vxpose.xlu0.b32.cont [2/16] 0.0, 128
        %1549 = vxpose.xlu0.b32.cont [3/16] 0.0, 128
        %1550 = vxpose.xlu0.b32.cont [4/16] 0.0, 128
        %1551 = vxpose.xlu0.b32.cont [5/16] 0.0, 128
        %1552 = vxpose.xlu0.b32.cont [6/16] 0.0, 128
        %1553 = vxpose.xlu0.b32.cont [7/16] 0.0, 128
        %1554 = vxpose.xlu0.b32.cont [8/16] 0.0, 128
        %1555 = vxpose.xlu0.b32.cont [9/16] 0.0, 128
        %1556 = vxpose.xlu0.b32.cont [10/16] 0.0, 128
        %1557 = vxpose.xlu0.b32.cont [11/16] 0.0, 128
        %1558 = vxpose.xlu0.b32.cont [12/16] 0.0, 128
        %1559 = vxpose.xlu0.b32.cont [13/16] 0.0, 128
        %1560 = vxpose.xlu0.b32.cont [14/16] 0.0, 128
        %1561 = vxpose.xlu0.b32.cont [15/16] 0.0, 128
        %1562 = vxpose.xlu0.b32.end [16/16] 0.0, 128
        %v1563 = vpop.trf.xlu0
        %v1564 = vpop.trf.xlu0
        %v1565 = vpop.trf.xlu0
        %v1566 = vpop.trf.xlu0
        %v1567 = vpop.trf.xlu0
        %v1568 = vpop.trf.xlu0
        %v1569 = vpop.trf.xlu0
        %v1570 = vpop.trf.xlu0
        %v1571 = vpop.trf.xlu0
        %v1572 = vpop.trf.xlu0
        %v1573 = vpop.trf.xlu0
        %v1574 = vpop.trf.xlu0
        %v1575 = vpop.trf.xlu0
        %v1576 = vpop.trf.xlu0
        %v1577 = vpop.trf.xlu0
        %v1578 = vpop.trf.xlu0
        %v1579 = vld [vmem:[#allocation20] sm:$0xff]
        %v1580 = vld [vmem:[#allocation20 + $0x8] sm:$0xff]
        %v1581 = vld [vmem:[#allocation20 + $0x10] sm:$0xff]
        %v1582 = vld [vmem:[#allocation20 + $0x18] sm:$0xff]
        %v1583 = vld [vmem:[#allocation20 + $0x20] sm:$0xff]
        %v1584 = vpack.c.bf16 %v1580, %v1579
        %v1585 = vpack.c.bf16 %v1582, %v1581
        %v1586 = vpack.c.bf16 %v1583, %v1583
        %v1587 = vpack.c.bf16 %v1564, %v1563
        %v1588 = vpack.c.bf16 %v1566, %v1565
        %v1589 = vld [vmem:[#allocation21] sm:$0xff]
        %v1590 = vld [vmem:[#allocation21 + $0x8] sm:$0xff]
        %v1591 = vld [vmem:[#allocation21 + $0x10] sm:$0xff]
        %v1592 = vld [vmem:[#allocation21 + $0x18] sm:$0xff]
        %v1593 = vld [vmem:[#allocation21 + $0x20] sm:$0xff]
        %1595 = vset.pattern.permute.xlu0 0
        %1596 = vperm.xlu0 %1595, %v1589
        %v1597 = vpop.permute.xlu0 %1596
        %1600 = vset.pattern.permute.xlu0 0
        %1601 = vperm.xlu0 %1600, %v1590
        %v1602 = vpop.permute.xlu0 %1601
        %1605 = vset.pattern.permute.xlu0 0
        %1606 = vperm.xlu0 %1605, %v1591
        %v1607 = vpop.permute.xlu0 %1606
        %1610 = vset.pattern.permute.xlu0 0
        %1611 = vperm.xlu0 %1610, %v1592
        %v1612 = vpop.permute.xlu0 %1611
        %1615 = vset.pattern.permute.xlu0 0
        %1616 = vperm.xlu0 %1615, %v1593
        %v1617 = vpop.permute.xlu0 %1616
        %v1620 = vsel %vm800, %v1584, 0
        %v1623 = vsel %vm800, %v1585, 0
        %v1626 = vsel %vm800, %v1586, 0
        %1628 = vmatprep.subr.bf16.mxu0 0
        %1629 = vmatpush1.bf16.msra.mxu0 %v1587
        %1630 = vmatprep.subr.bf16.mxu0 0
        %1631 = vmatpush1.bf16.msra.mxu0 %v1588
        %1632 = vmatprep.subr.bf16.mxu0 0
        %1633 = vmatpush1.bf16.msra.mxu0 0
        %1634 = vmatprep.subr.bf16.mxu0 0
        %1635 = vmatpush1.bf16.msra.mxu0 0
        %1636 = vmatprep.subr.bf16.mxu0 0
        %1637 = vmatpush1.bf16.msra.mxu0 0
        %1638 = vmatprep.subr.bf16.mxu0 0
        %1639 = vmatpush1.bf16.msra.mxu0 0
        %1640 = vmatprep.subr.bf16.mxu0 0
        %1641 = vmatpush1.bf16.msra.mxu0 0
        %1642 = vmatprep.subr.bf16.mxu0 0
        %1643 = vmatpush1.bf16.msra.mxu0 0
        %1644 = vmatprep.subr.bf16.mxu0 0
        %1645 = vmatpush1.bf16.msra.mxu0 0
        %1646 = vmatprep.subr.bf16.mxu0 0
        %1647 = vmatpush1.bf16.msra.mxu0 0
        %1648 = vmatprep.subr.bf16.mxu0 0
        %1649 = vmatpush1.bf16.msra.mxu0 0
        %1650 = vmatprep.subr.bf16.mxu0 0
        %1651 = vmatpush1.bf16.msra.mxu0 0
        %1652 = vmatprep.subr.bf16.mxu0 0
        %1653 = vmatpush1.bf16.msra.mxu0 0
        %1654 = vmatprep.subr.bf16.mxu0 0
        %1655 = vmatpush1.bf16.msra.mxu0 0
        %1656 = vmatprep.subr.bf16.mxu0 0
        %1657 = vmatpush1.bf16.msra.mxu0 0
        %1658 = vmatprep.subr.bf16.mxu0 0
        %1659 = vmatpush1.bf16.msra.mxu0 0
        %1660 = vmatprep.mubr.bf16.mxu0 0
        %1661 = vmatmul.mubr.bf16.gmra.mrb[0].mxu0 %v1620
        %v1662 = vpop.f32.mrb[0].mxu0
        %v1663 = vadd.f32 %v1597, %v1662
        %v1664 = vpop.f32.mrb[0].mxu0
        %v1665 = vpop.f32.mrb[0].mxu0
        %v1666 = vadd.f32 %v1602, %v1665
        %v1667 = vpop.f32.mrb[0].mxu0
        %1668 = vmatprep.mubr.bf16.mxu0 0
        %1669 = vmatmul.mubr.bf16.gmra.mrb[0].mxu0 %v1623
        %v1670 = vpop.f32.mrb[0].mxu0
        %v1671 = vadd.f32 %v1607, %v1670
        %v1672 = vpop.f32.mrb[0].mxu0
        %v1673 = vpop.f32.mrb[0].mxu0
        %v1674 = vadd.f32 %v1612, %v1673
        %v1675 = vpop.f32.mrb[0].mxu0
        %1676 = vmatprep.mubr.bf16.mxu0 0
        %1677 = vmatmul.mubr.bf16.gmra.mrb[0].mxu0 %v1626
        %v1678 = vpop.f32.mrb[0].mxu0
        %v1679 = vadd.f32 %v1617, %v1678
        %v1680 = vpop.f32.mrb[0].mxu0
        %v1681 = vpop.f32.mrb[0].mxu0
        %v1682 = vpop.f32.mrb[0].mxu0
        %1683 = vdwg.mxu0
        %vm1684 = vcmp.gt.f32.partialorder %v1663, 0.0
        %vm1685 = vcmp.gt.f32.partialorder %v1666, 0.0
        %vm1686 = vcmp.gt.f32.partialorder %v1671, 0.0
        %vm1687 = vcmp.gt.f32.partialorder %v1674, 0.0
        %v1688 = vmul.f32 %v1663, 0.01
        %v1689 = vmul.f32 %v1666, 0.01
        %v1690 = vmul.f32 %v1671, 0.01
        %v1691 = vmul.f32 %v1674, 0.01
        %v1692 = vsel %vm1684, %v1663, %v1688
        %v1693 = vsel %vm1685, %v1666, %v1689
        %v1694 = vsel %vm1686, %v1671, %v1690
        %v1695 = vsel %vm1687, %v1674, %v1691
        %v1696 = vld [vmem:[#allocation23] sm:$0x1]
        %v1697 = vpack.c.bf16 %v1696, %v1696
        %v1698 = vpack.c.bf16 %v1693, %v1692
        %v1699 = vpack.c.bf16 %v1695, %v1694
        %v1700 = vld [vmem:[#allocation2] sm:$0x1]
        %1702 = vset.pattern.permute.xlu0 0
        %1703 = vperm.xlu0 %1702, %v1700
        %v1704 = vpop.permute.xlu0 %1703
        %v1706 = vlaneseq
        %v1707 = vshrl.u32 %v1706, 7
        %v1708 = vsub.s32 0, %v1707
        %v1709 = vrot.slane %v1704, %v1708
        %v1711 = vsel %vm800, %v1697, 0
        %1713 = vmatprep.subr.bf16.mxu0 0
        %1714 = vmatpush1.bf16.msra.mxu0 %v1698
        %1715 = vmatprep.subr.bf16.mxu0 0
        %1716 = vmatpush1.bf16.msra.mxu0 %v1699
        %1717 = vmatprep.subr.bf16.mxu0 0
        %1718 = vmatpush1.bf16.msra.mxu0 0
        %1719 = vmatprep.subr.bf16.mxu0 0
        %1720 = vmatpush1.bf16.msra.mxu0 0
        %1721 = vmatprep.subr.bf16.mxu0 0
        %1722 = vmatpush1.bf16.msra.mxu0 0
        %1723 = vmatprep.subr.bf16.mxu0 0
        %1724 = vmatpush1.bf16.msra.mxu0 0
        %1725 = vmatprep.subr.bf16.mxu0 0
        %1726 = vmatpush1.bf16.msra.mxu0 0
        %1727 = vmatprep.subr.bf16.mxu0 0
        %1728 = vmatpush1.bf16.msra.mxu0 0
        %1729 = vmatprep.subr.bf16.mxu0 0
        %1730 = vmatpush1.bf16.msra.mxu0 0
        %1731 = vmatprep.subr.bf16.mxu0 0
        %1732 = vmatpush1.bf16.msra.mxu0 0
        %1733 = vmatprep.subr.bf16.mxu0 0
        %1734 = vmatpush1.bf16.msra.mxu0 0
        %1735 = vmatprep.subr.bf16.mxu0 0
        %1736 = vmatpush1.bf16.msra.mxu0 0
        %1737 = vmatprep.subr.bf16.mxu0 0
        %1738 = vmatpush1.bf16.msra.mxu0 0
        %1739 = vmatprep.subr.bf16.mxu0 0
        %1740 = vmatpush1.bf16.msra.mxu0 0
        %1741 = vmatprep.subr.bf16.mxu0 0
        %1742 = vmatpush1.bf16.msra.mxu0 0
        %1743 = vmatprep.subr.bf16.mxu0 0
        %1744 = vmatpush1.bf16.msra.mxu0 0
        %1745 = vmatprep.mubr.bf16.mxu0 0
        %1746 = vmatmul.mubr.bf16.gmra.mrb[0].mxu0 %v1711
        %v1747 = vpop.f32.mrb[0].mxu0
        %v1748 = vadd.f32 %v1709, %v1747
        %v1749 = vpop.f32.mrb[0].mxu0
        %v1750 = vpop.f32.mrb[0].mxu0
        %v1751 = vpop.f32.mrb[0].mxu0
        %1752 = vdwg.mxu0
        %v1753 = vpack.c.bf16 %v1538, %v1538
        %v1754 = vpack.c.bf16 %v1679, %v1679
        %v1756 = vsel %vm1447, %v1753, 0
        %v1759 = vsel %vm1451, %v1754, 0
        %1761 = vmatprep.subr.bf16.mxu0 0
        %1762 = vmatpush1.bf16.msra.mxu0 %v1759
        %1763 = vmatprep.subr.bf16.mxu0 0
        %1764 = vmatpush1.bf16.msra.mxu0 0
        %1765 = vmatprep.subr.bf16.mxu0 0
        %1766 = vmatpush1.bf16.msra.mxu0 0
        %1767 = vmatprep.subr.bf16.mxu0 0
        %1768 = vmatpush1.bf16.msra.mxu0 0
        %1769 = vmatprep.subr.bf16.mxu0 0
        %1770 = vmatpush1.bf16.msra.mxu0 0
        %1771 = vmatprep.subr.bf16.mxu0 0
        %1772 = vmatpush1.bf16.msra.mxu0 0
        %1773 = vmatprep.subr.bf16.mxu0 0
        %1774 = vmatpush1.bf16.msra.mxu0 0
        %1775 = vmatprep.subr.bf16.mxu0 0
        %1776 = vmatpush1.bf16.msra.mxu0 0
        %1777 = vmatprep.subr.bf16.mxu0 0
        %1778 = vmatpush1.bf16.msra.mxu0 0
        %1779 = vmatprep.subr.bf16.mxu0 0
        %1780 = vmatpush1.bf16.msra.mxu0 0
        %1781 = vmatprep.subr.bf16.mxu0 0
        %1782 = vmatpush1.bf16.msra.mxu0 0
        %1783 = vmatprep.subr.bf16.mxu0 0
        %1784 = vmatpush1.bf16.msra.mxu0 0
        %1785 = vmatprep.subr.bf16.mxu0 0
        %1786 = vmatpush1.bf16.msra.mxu0 0
        %1787 = vmatprep.subr.bf16.mxu0 0
        %1788 = vmatpush1.bf16.msra.mxu0 0
        %1789 = vmatprep.subr.bf16.mxu0 0
        %1790 = vmatpush1.bf16.msra.mxu0 0
        %1791 = vmatprep.subr.bf16.mxu0 0
        %1792 = vmatpush1.bf16.msra.mxu0 0
        %1793 = vmatprep.mubr.bf16.mxu0 0
        %1794 = vmatmul.mubr.bf16.gmra.mrb[0].mxu0 %v1756
        %v1795 = vpop.f32.mrb[0].mxu0
        %v1796 = vadd.f32 0.0, %v1795
        %v1797 = vpop.f32.mrb[0].mxu0
        %v1798 = vpop.f32.mrb[0].mxu0
        %v1799 = vpop.f32.mrb[0].mxu0
        %1800 = vdwg.mxu0
        %v1801 = vadd.f32 %v1748, %v1796
        %vm1802 = vcmask 57344
        %1803 = vst.msk [vmem:[%s669] sm:$0x1] %vm1802, %v1801
        %s1804 = sand.u32 %s353, 1
        %s1805 = scalar_lea.sflag [#allocation5], %s1804
        %s1806 = sand.u32 %s353, 1
        %s1807 = scalar_lea.vmem [#allocation24], %s1806
        // Predicated region
        $region129: #{factorvae_forward_batched.1} parent=75 // pred_check
          %p1808 = pneg %p363
        $region130: #{factorvae_forward_batched.1} parent=75 // pred_check_branch
          %1810 = sbr.rel (%p1808) target = $region132
        $region131: #{factorvae_forward_batched.1} parent=75 // pred_region
          %s1812 = ssub.s32 16, 16
          %1813 = vsyncadd %s1805, %s1812
          %s1814 = smul.addr %s41, 16
          %s1815 = scalar_lea.hbm %s14, %s1814
          %s1817 = sshll.u32 %s1807, 4
          %s1818 = int_to_ptr.vmem [resolvable:$true] %s1817
          %1820 = dma.vmem_to_hbm [thread:$0]  %s1818, 16, %s1815, %s1805
        $region132: #{factorvae_forward_batched.1} parent=75 // pred_fallthru
          _
      $region76: #{factorvae_forward_batched.1} parent=5 // pred_fallthru
        _
      %p1821 = scmp.le.s32.totalorder 2, %s36
      // Predicated region
      $region133: #{factorvae_forward_batched.1} parent=5 // pred_check
        %p1822 = pneg %p1821
      $region134: #{factorvae_forward_batched.1} parent=5 // pred_check_branch
        %1824 = sbr.rel (%p1822) target = $region136
      $region135: #{factorvae_forward_batched.1} parent=5 // pred_region
        %s1825 = ssub.s32 %s36, 2
        // Predicated region
        $region137: #{factorvae_forward_batched.1} parent=135 // pred_check
          %p1826 = pneg %p369
        $region138: #{factorvae_forward_batched.1} parent=135 // pred_check_branch
          %1828 = sbr.rel (%p1826) target = $region140
        $region139: #{factorvae_forward_batched.1} parent=135 // pred_region
          %s1829 = sand.u32 %s354, 1
          %s1830 = scalar_lea.sflag [#allocation5], %s1829
          %s1831 = sand.u32 %s354, 1
          %s1832 = scalar_lea.vmem [#allocation24], %s1831
          %1833 = dma.done %s1830, 16
        $region140: #{factorvae_forward_batched.1} parent=135 // pred_fallthru
          _
      $region136: #{factorvae_forward_batched.1} parent=5 // pred_fallthru
        _
    $region6: #{factorvae_forward_batched.1} parent=1 // loop_footer
      %s40 = sadd.s32 1, %s36
    $region7: #{factorvae_forward_batched.1} parent=1 // loop_footer_branch
      %35 = sbr.rel target = $region3
    $region8: #{factorvae_forward_batched.1} parent=1 // loop_exit
      _
    %1834 = vsyncpa [#allocation4], 1
    %s1835 = scalar_lea.sflag [#allocation4], 1
    %1836 = vsyncpa %s1835, 1
    %1837 = vsyncpa [#allocation7], 1
    %s1838 = scalar_lea.sflag [#allocation7], 1
    %1839 = vsyncpa %s1838, 1
    %1840 = vsyncpa [#allocation10], 1
    %1841 = vsyncpa [#allocation13], 1
    %1842 = vsyncpa [#allocation16], 1
    %1843 = vsyncpa [#allocation19], 1
    %1844 = vsyncpa [#allocation22], 1
    %1845 = vsyncpa [#allocation5], 1
    %s1846 = scalar_lea.sflag [#allocation5], 1
    %1847 = vsyncpa %s1846, 1

</llo_original>
